<compile_context>
chip_gen: v7x
topology: tpu7x:2x2x1
jax: 0.10.0
libtpu: 0.0.40
codegen_flags: <defaults>
</compile_context>

<pallas_src>
import jax
import jax.numpy as jnp
from jax.experimental import pallas as pl
from jax.experimental.pallas import tpu as pltpu


_VMEM_BUDGET = 16 * 1024 * 1024   # target for the double-buffered per-step working set
_VMEM_LIMIT = 32 * 1024 * 1024    # scoped VMEM limit handed to Mosaic (safe on v5e/v6e/v7x)


def _round_up(x, m):
    return ((x + m - 1) // m) * m


def _divisors_desc(n):
    ds = set()
    i = 1
    while i * i <= n:
        if n % i == 0:
            ds.add(i)
            ds.add(n // i)
        i += 1
    return sorted(ds, reverse=True)


def _choose_rows(rows, w, itemsize):
    """Pick TR = input rows per grid step for the (rows, W) -> (rows, 4W) kernel."""
    sub = max(8, 32 // itemsize)   # sublane multiple (8 f32, 16 bf16, 32 int8)
    # Double-buffered VMEM per row: padded input row + padded output row, x2 buffers.
    per_row = 2 * (_round_up(w, 128) + _round_up(4 * w, 128)) * itemsize
    max_rows = max(sub, _VMEM_BUDGET // per_row)

    # Exact-divisor blocks satisfying the sublane constraint (TR % 8 == 0 or TR == rows).
    cands = [d for d in _divisors_desc(rows)
             if d <= max_rows and (d % sub == 0 or d == rows)]
    if cands:
        multi = [d for d in cands if rows // d >= 2]   # keep >= 2 grid steps (megacore)
        return multi[0] if multi else cands[0]
    # No exact divisor fits the budget: ragged last block (Pallas masks OOB rows).
    return max(sub, (max_rows // sub) * sub)


def _upsample_kernel(x_ref, o_ref):
    x = x_ref[...]                          # (TR, W)
    tr, w = x.shape
    # 1) W-duplication: one lane interleave on the input-sized tile.
    #    dup[r, 2w+b] = x[r, w]
    dup = jnp.broadcast_to(x[:, :, None], (tr, w, 2)).reshape(tr, 2 * w)
    # 2) H-duplication is absorbed into the lane axis: the two output rows for
    #    each input row are the same 2W-wide vector stored back-to-back, so the
    #    whole block is one lane concat + one full-block store.
    o_ref[...] = jnp.concatenate([dup, dup], axis=-1)   # (TR, 4W)


def up_sample(X):
    """Pallas equivalent of F.interpolate(X, scale_factor=(2, 2)) (nearest, NCHW)."""
    N, C, H, W = X.shape
    rows = N * C * H
    x2 = X.reshape(rows, W)                              # free row-major reshape
    itemsize = jnp.dtype(X.dtype).itemsize

    TR = _choose_rows(rows, W, itemsize)
    grid = (pl.cdiv(rows, TR),)

    out2 = pl.pallas_call(
        _upsample_kernel,
        out_shape=jax.ShapeDtypeStruct((rows, 4 * W), X.dtype),
        grid_spec=pltpu.PrefetchScalarGridSpec(
            num_scalar_prefetch=0,
            grid=grid,
            in_specs=[pl.BlockSpec((TR, W), lambda i: (i, 0))],
            out_specs=pl.BlockSpec((TR, 4 * W), lambda i: (i, 0)),
        ),
        compiler_params=pltpu.CompilerParams(
            dimension_semantics=("parallel",),
            vmem_limit_bytes=_VMEM_LIMIT,
        ),
    )(x2)

    # (rows, 4W) row-major is exactly (N, C, 2H, 2W) row-major: free reshape.
    return out2.reshape(N, C, 2 * H, 2 * W)


if __name__ == "__main__":
    key = jax.random.PRNGKey(0)
    # Small NCHW feature map consistent with the U-Net module.
    N, C, H, W = 2, 4, 16, 16
    x = jax.random.normal(key, (N, C, H, W), dtype=jnp.float32)

    out = up_sample(x)
    jax.block_until_ready(out)

    # Reference: nearest-neighbor 2x upsample along H and W.
    ref = jnp.repeat(jnp.repeat(x, 2, axis=2), 2, axis=3)
    assert out.shape == (N, C, 2 * H, 2 * W), out.shape
    assert out.dtype == x.dtype
    assert jnp.array_equal(out, ref), "mismatch vs reference"

    print("KERNEL_OK")
</pallas_src>

<mosaic_0001>
module attributes {stable_mosaic.version = 11 : i64} {
  func.func @_upsample_kernel(%arg0: i32, %arg1: memref<64x16xf32, #tpu.memory_space<vmem>>, %arg2: memref<64x64xf32, #tpu.memory_space<vmem>>) attributes {dimension_semantics = [#tpu.dimension_semantics<parallel>], iteration_bounds = array<i64: 2>, scalar_prefetch = 0 : i64, scratch_operands = 0 : i64, tpu.core_type = #tpu.core_type<tc>, window_params = [{transform_indices = @transform_0, window_bounds = array<i64: 64, 16>}, {transform_indices = @transform_1, window_bounds = array<i64: 64, 64>}]} {
    %c0 = arith.constant 0 : index
    %c0_0 = arith.constant 0 : index
    %0 = vector.load %arg1[%c0, %c0_0] : memref<64x16xf32, #tpu.memory_space<vmem>>, vector<64x16xf32>
    %1 = vector.shape_cast %0 : vector<64x16xf32> to vector<64x16x1xf32>
    %2 = vector.shape_cast %1 : vector<64x16x1xf32> to vector<64x16x1xf32>
    %3 = vector.broadcast %2 : vector<64x16x1xf32> to vector<64x16x2xf32>
    %4 = vector.shape_cast %3 : vector<64x16x2xf32> to vector<64x32xf32>
    %5 = tpu.concatenate %4, %4 in 1 : vector<64x32xf32>, vector<64x32xf32> -> vector<64x64xf32>
    %c0_1 = arith.constant 0 : index
    %c0_2 = arith.constant 0 : index
    %6 = vector.load %arg2[%c0_1, %c0_2] : memref<64x64xf32, #tpu.memory_space<vmem>>, vector<64x64xf32>
    tpu.vector_store %arg2[%c0_1, %c0_2], %5 {strides = array<i32>} : memref<64x64xf32, #tpu.memory_space<vmem>>, vector<64x64xf32>,
    return
  }
  func.func @transform_0(%arg0: i32) -> (i32, i32) {
    %c0_i32 = arith.constant 0 : i32
    %c0_i32_0 = arith.constant 0 : i32
    return %arg0, %c0_i32 : i32, i32
  }
  func.func @transform_1(%arg0: i32) -> (i32, i32) {
    %c0_i32 = arith.constant 0 : i32
    %c0_i32_0 = arith.constant 0 : i32
    return %arg0, %c0_i32 : i32, i32
  }
}

</mosaic_0001>

<llo_original>
// kernel: tpu_custom_call.1
$region0: #{tpu_custom_call.1}
  #allocation0 [shape = 'u32[]', space=smem, size = 0x4, offset = 0x4, fixed_abs, tag = 'smem constant byte address 0x4 - core index']
  #allocation1 [shape = 'u32[144,128]{1,0:T(1,128)}', space=vmem, size = 0x12000, scoped, tag = 'internal scratch']
  %s0 = inlined_call_operand.vmem [shape: f32[128,16], index: 0, kind: input, shape index: {}]
  %s1 = inlined_call_operand.vmem [shape: f32[128,64], index: 1, kind: output, shape index: {}]
  %s2 = sld [smem:[#allocation0]]
  $region37: #{tpu_custom_call.1} parent=0
    _
  %s4 = ssub.s32 1, %s2
  %s5 = scalar_select 0, %s4, %s2
  loop: start=0, step=1, limit=4
  $region2: #{tpu_custom_call.1} parent=0 // loop_pre_header
    _
  $region3: #{tpu_custom_call.1} parent=0 // loop_header
    %s7 = sphi 0, %s11
    %p8 = scmp.ge.s32.totalorder %s7, 4
    %s17 = sphi 0, %s19
    %s20 = sphi 0, %s17
    %s21 = sphi 0, %s20
    %s37 = sphi 0, %s21
    %s43 = sphi 0, %s45
    %s46 = sphi 0, %s43
    %s47 = sphi 0, %s46
    %s63 = sphi 0, %s47
  $region4: #{tpu_custom_call.1} parent=0 // loop_header_branch
    %10 = sbr.rel (%p8) target = $region8
  $region5: #{tpu_custom_call.1} parent=0 // loop_body
    %s12 = ssub.s32 %s7, 1
    %s13 = ssub.s32 %s7, 2
    %s14 = sadd.s32 %s7, 1
    %s15 = ssub.s32 %s7, %s14
    %p16 = scmp.eq.s32.totalorder %s15, 0
    %s18 = sadd.s32 %s17, 1
    %s19 = scalar_select %p16, %s17, %s18
    %p22 = pneg %p16
    %p23 = scmp.eq.s32.totalorder %s7, 1
    %p24 = por %p22, %p23
    %p25 = scmp.ne.s32.totalorder %s17, %s20
    %p26 = scmp.eq.s32.totalorder %s7, 0
    %p27 = por %p25, %p26
    %p28 = scmp.ne.s32.totalorder %s17, %s20
    %p29 = scmp.eq.s32.totalorder %s12, 1
    %p30 = por %p28, %p29
    %p31 = scmp.ne.s32.totalorder %s20, %s21
    %p32 = scmp.eq.s32.totalorder %s12, 0
    %p33 = por %p31, %p32
    %p34 = scmp.ne.s32.totalorder %s20, %s21
    %p35 = scmp.eq.s32.totalorder %s13, 1
    %p36 = por %p34, %p35
    %p38 = scmp.ne.s32.totalorder %s21, %s37
    %p39 = scmp.eq.s32.totalorder %s13, 0
    %p40 = por %p38, %p39
    %s41 = ssub.s32 %s7, %s14
    %p42 = scmp.eq.s32.totalorder %s41, 0
    %s44 = sadd.s32 %s43, 1
    %s45 = scalar_select %p42, %s43, %s44
    %p48 = pneg %p42
    %p49 = scmp.eq.s32.totalorder %s7, 1
    %p50 = por %p48, %p49
    %p51 = scmp.ne.s32.totalorder %s43, %s46
    %p52 = scmp.eq.s32.totalorder %s7, 0
    %p53 = por %p51, %p52
    %p54 = scmp.ne.s32.totalorder %s43, %s46
    %p55 = scmp.eq.s32.totalorder %s12, 1
    %p56 = por %p54, %p55
    %p57 = scmp.ne.s32.totalorder %s46, %s47
    %p58 = scmp.eq.s32.totalorder %s12, 0
    %p59 = por %p57, %p58
    %p60 = scmp.ne.s32.totalorder %s46, %s47
    %p61 = scmp.eq.s32.totalorder %s13, 1
    %p62 = por %p60, %p61
    %p64 = scmp.ne.s32.totalorder %s47, %s63
    %p65 = scmp.eq.s32.totalorder %s13, 0
    %p66 = por %p64, %p65
    %p67 = scmp.le.s32.totalorder 1, %s7
    %p68 = scmp.lt.s32.totalorder %s7, 3
    %p69 = pnand %p67, %p68
    %p70 = pneg %p69
    // Predicated region
    $region9: #{tpu_custom_call.1} parent=5 // pred_check
      _
    $region10: #{tpu_custom_call.1} parent=5 // pred_check_branch
      %72 = sbr.rel (%p69) target = $region12
    $region11: #{tpu_custom_call.1} parent=5 // pred_region
      %s73 = ssub.s32 %s7, 1
    $region12: #{tpu_custom_call.1} parent=5 // pred_fallthru
      _
    %p74 = scmp.lt.s32.totalorder %s7, 2
    // Predicated region
    $region13: #{tpu_custom_call.1} parent=5 // pred_check
      %p75 = pneg %p74
    $region14: #{tpu_custom_call.1} parent=5 // pred_check_branch
      %77 = sbr.rel (%p75) target = $region16
    $region15: #{tpu_custom_call.1} parent=5 // pred_region
      // Predicated region
      $region17: #{tpu_custom_call.1} parent=15 // pred_check
        %p78 = pneg %p27
      $region18: #{tpu_custom_call.1} parent=15 // pred_check_branch
        %80 = sbr.rel (%p78) target = $region20
      $region19: #{tpu_custom_call.1} parent=15 // pred_region
        %s81 = smul.u32 8, %s7
        %p82 = scmp.lt.s32.totalorder %s81, 15
        %s83 = scalar_select %p82, %s81, 15
        %s84 = smul.addr %s83, 8
        %s85 = scalar_lea.vmem %s0, %s84
        %s86 = smul.u32 8, %s7
      $region20: #{tpu_custom_call.1} parent=15 // pred_fallthru
        _
    $region16: #{tpu_custom_call.1} parent=5 // pred_fallthru
      _
    %p87 = scmp.le.s32.totalorder 1, %s7
    %p88 = scmp.lt.s32.totalorder %s7, 3
    %p89 = pnand %p87, %p88
    %p90 = pneg %p89
    // Predicated region
    $region21: #{tpu_custom_call.1} parent=5 // pred_check
      _
    $region22: #{tpu_custom_call.1} parent=5 // pred_check_branch
      %92 = sbr.rel (%p89) target = $region24
    $region23: #{tpu_custom_call.1} parent=5 // pred_region
      %s93 = ssub.s32 %s7, 1
      %s94 = smul.u32 8, %s12
      %p95 = scmp.lt.s32.totalorder %s94, 15
      %s96 = scalar_select %p95, %s94, 15
      %s97 = smul.addr %s96, 8
      %s98 = scalar_lea.vmem %s0, %s97
      %p99 = pneg %p33
      %p100 = pneg %p30
      %p101 = pneg %p59
      %p102 = pneg %p56
      %s103 = smul.u32 8, %s12
      %p104 = scmp.lt.s32.totalorder %s103, 15
      %s105 = scalar_select %p104, %s103, 15
      %s106 = smul.addr %s105, 8
      %s107 = scalar_lea.vmem %s1, %s106
      %s108 = smul.u32 8, %s12
      %p109 = scmp.lt.s32.totalorder %s108, 15
      %s110 = scalar_select %p109, %s108, 15
      %s111 = smul.addr %s110, 8
      %s112 = scalar_lea.vmem %s0, %s111
      %s113 = smul.u32 8, %s12
      %s114 = smul.u32 8, %s12
      %p115 = scmp.lt.s32.totalorder %s114, 15
      %s116 = scalar_select %p115, %s114, 15
      %s117 = smul.addr %s116, 8
      %s118 = scalar_lea.vmem %s1, %s117
      %s119 = smul.u32 8, %s12
      %v120 = vld [vmem:[%s112] sm:$0xff]
      %v121 = vld [vmem:[%s112 + $0x8] sm:$0xff]
      %v122 = vld [vmem:[%s112 + $0x10] sm:$0xff]
      %v123 = vld [vmem:[%s112 + $0x18] sm:$0xff]
      %v124 = vld [vmem:[%s112 + $0x20] sm:$0xff]
      %v125 = vld [vmem:[%s112 + $0x28] sm:$0xff]
      %v126 = vld [vmem:[%s112 + $0x30] sm:$0xff]
      %v127 = vld [vmem:[%s112 + $0x38] sm:$0xff]
      %v128 = vlaneseq
      %v129 = vshrl.u32 %v128, 7
      %v130 = vsub.s32 0, %v129
      %v131 = vrot.slane %v120, %v130
      %133 = vbcast.lane.b32.xlu0 %v131, 256
      %v134 = vpop.permute.xlu0 %133
      %s136 = sor.u32 256, 8
      %137 = vbcast.lane.b32.xlu0 %v131, %s136
      %v138 = vpop.permute.xlu0 %137
      %v139 = vlaneseq
      %v140 = vshrl.u32 %v139, 7
      %v141 = vsub.s32 1, %v140
      %v142 = vrot.slane %v120, %v141
      %144 = vbcast.lane.b32.xlu0 %v142, 256
      %v145 = vpop.permute.xlu0 %144
      %s147 = sor.u32 256, 8
      %148 = vbcast.lane.b32.xlu0 %v142, %s147
      %v149 = vpop.permute.xlu0 %148
      %v150 = vlaneseq
      %v151 = vshrl.u32 %v150, 7
      %v152 = vsub.s32 2, %v151
      %v153 = vrot.slane %v120, %v152
      %155 = vbcast.lane.b32.xlu0 %v153, 256
      %v156 = vpop.permute.xlu0 %155
      %s158 = sor.u32 256, 8
      %159 = vbcast.lane.b32.xlu0 %v153, %s158
      %v160 = vpop.permute.xlu0 %159
      %v161 = vlaneseq
      %v162 = vshrl.u32 %v161, 7
      %v163 = vsub.s32 3, %v162
      %v164 = vrot.slane %v120, %v163
      %166 = vbcast.lane.b32.xlu0 %v164, 256
      %v167 = vpop.permute.xlu0 %166
      %s169 = sor.u32 256, 8
      %170 = vbcast.lane.b32.xlu0 %v164, %s169
      %v171 = vpop.permute.xlu0 %170
      %v172 = vlaneseq
      %v173 = vshrl.u32 %v172, 7
      %v174 = vsub.s32 4, %v173
      %v175 = vrot.slane %v120, %v174
      %177 = vbcast.lane.b32.xlu0 %v175, 256
      %v178 = vpop.permute.xlu0 %177
      %s180 = sor.u32 256, 8
      %181 = vbcast.lane.b32.xlu0 %v175, %s180
      %v182 = vpop.permute.xlu0 %181
      %v183 = vlaneseq
      %v184 = vshrl.u32 %v183, 7
      %v185 = vsub.s32 5, %v184
      %v186 = vrot.slane %v120, %v185
      %188 = vbcast.lane.b32.xlu0 %v186, 256
      %v189 = vpop.permute.xlu0 %188
      %s191 = sor.u32 256, 8
      %192 = vbcast.lane.b32.xlu0 %v186, %s191
      %v193 = vpop.permute.xlu0 %192
      %v194 = vlaneseq
      %v195 = vshrl.u32 %v194, 7
      %v196 = vsub.s32 6, %v195
      %v197 = vrot.slane %v120, %v196
      %199 = vbcast.lane.b32.xlu0 %v197, 256
      %v200 = vpop.permute.xlu0 %199
      %s202 = sor.u32 256, 8
      %203 = vbcast.lane.b32.xlu0 %v197, %s202
      %v204 = vpop.permute.xlu0 %203
      %v205 = vlaneseq
      %v206 = vshrl.u32 %v205, 7
      %v207 = vsub.s32 7, %v206
      %v208 = vrot.slane %v120, %v207
      %210 = vbcast.lane.b32.xlu0 %v208, 256
      %v211 = vpop.permute.xlu0 %210
      %s213 = sor.u32 256, 8
      %214 = vbcast.lane.b32.xlu0 %v208, %s213
      %v215 = vpop.permute.xlu0 %214
      %v216 = vlaneseq
      %v217 = vshrl.u32 %v216, 7
      %v218 = vsub.s32 0, %v217
      %v219 = vrot.slane %v121, %v218
      %221 = vbcast.lane.b32.xlu0 %v219, 256
      %v222 = vpop.permute.xlu0 %221
      %s224 = sor.u32 256, 8
      %225 = vbcast.lane.b32.xlu0 %v219, %s224
      %v226 = vpop.permute.xlu0 %225
      %v227 = vlaneseq
      %v228 = vshrl.u32 %v227, 7
      %v229 = vsub.s32 1, %v228
      %v230 = vrot.slane %v121, %v229
      %232 = vbcast.lane.b32.xlu0 %v230, 256
      %v233 = vpop.permute.xlu0 %232
      %s235 = sor.u32 256, 8
      %236 = vbcast.lane.b32.xlu0 %v230, %s235
      %v237 = vpop.permute.xlu0 %236
      %v238 = vlaneseq
      %v239 = vshrl.u32 %v238, 7
      %v240 = vsub.s32 2, %v239
      %v241 = vrot.slane %v121, %v240
      %243 = vbcast.lane.b32.xlu0 %v241, 256
      %v244 = vpop.permute.xlu0 %243
      %s246 = sor.u32 256, 8
      %247 = vbcast.lane.b32.xlu0 %v241, %s246
      %v248 = vpop.permute.xlu0 %247
      %v249 = vlaneseq
      %v250 = vshrl.u32 %v249, 7
      %v251 = vsub.s32 3, %v250
      %v252 = vrot.slane %v121, %v251
      %254 = vbcast.lane.b32.xlu0 %v252, 256
      %v255 = vpop.permute.xlu0 %254
      %s257 = sor.u32 256, 8
      %258 = vbcast.lane.b32.xlu0 %v252, %s257
      %v259 = vpop.permute.xlu0 %258
      %v260 = vlaneseq
      %v261 = vshrl.u32 %v260, 7
      %v262 = vsub.s32 4, %v261
      %v263 = vrot.slane %v121, %v262
      %265 = vbcast.lane.b32.xlu0 %v263, 256
      %v266 = vpop.permute.xlu0 %265
      %s268 = sor.u32 256, 8
      %269 = vbcast.lane.b32.xlu0 %v263, %s268
      %v270 = vpop.permute.xlu0 %269
      %v271 = vlaneseq
      %v272 = vshrl.u32 %v271, 7
      %v273 = vsub.s32 5, %v272
      %v274 = vrot.slane %v121, %v273
      %276 = vbcast.lane.b32.xlu0 %v274, 256
      %v277 = vpop.permute.xlu0 %276
      %s279 = sor.u32 256, 8
      %280 = vbcast.lane.b32.xlu0 %v274, %s279
      %v281 = vpop.permute.xlu0 %280
      %v282 = vlaneseq
      %v283 = vshrl.u32 %v282, 7
      %v284 = vsub.s32 6, %v283
      %v285 = vrot.slane %v121, %v284
      %287 = vbcast.lane.b32.xlu0 %v285, 256
      %v288 = vpop.permute.xlu0 %287
      %s290 = sor.u32 256, 8
      %291 = vbcast.lane.b32.xlu0 %v285, %s290
      %v292 = vpop.permute.xlu0 %291
      %v293 = vlaneseq
      %v294 = vshrl.u32 %v293, 7
      %v295 = vsub.s32 7, %v294
      %v296 = vrot.slane %v121, %v295
      %298 = vbcast.lane.b32.xlu0 %v296, 256
      %v299 = vpop.permute.xlu0 %298
      %s301 = sor.u32 256, 8
      %302 = vbcast.lane.b32.xlu0 %v296, %s301
      %v303 = vpop.permute.xlu0 %302
      %v304 = vlaneseq
      %v305 = vshrl.u32 %v304, 7
      %v306 = vsub.s32 0, %v305
      %v307 = vrot.slane %v122, %v306
      %309 = vbcast.lane.b32.xlu0 %v307, 256
      %v310 = vpop.permute.xlu0 %309
      %s312 = sor.u32 256, 8
      %313 = vbcast.lane.b32.xlu0 %v307, %s312
      %v314 = vpop.permute.xlu0 %313
      %v315 = vlaneseq
      %v316 = vshrl.u32 %v315, 7
      %v317 = vsub.s32 1, %v316
      %v318 = vrot.slane %v122, %v317
      %320 = vbcast.lane.b32.xlu0 %v318, 256
      %v321 = vpop.permute.xlu0 %320
      %s323 = sor.u32 256, 8
      %324 = vbcast.lane.b32.xlu0 %v318, %s323
      %v325 = vpop.permute.xlu0 %324
      %v326 = vlaneseq
      %v327 = vshrl.u32 %v326, 7
      %v328 = vsub.s32 2, %v327
      %v329 = vrot.slane %v122, %v328
      %331 = vbcast.lane.b32.xlu0 %v329, 256
      %v332 = vpop.permute.xlu0 %331
      %s334 = sor.u32 256, 8
      %335 = vbcast.lane.b32.xlu0 %v329, %s334
      %v336 = vpop.permute.xlu0 %335
      %v337 = vlaneseq
      %v338 = vshrl.u32 %v337, 7
      %v339 = vsub.s32 3, %v338
      %v340 = vrot.slane %v122, %v339
      %342 = vbcast.lane.b32.xlu0 %v340, 256
      %v343 = vpop.permute.xlu0 %342
      %s345 = sor.u32 256, 8
      %346 = vbcast.lane.b32.xlu0 %v340, %s345
      %v347 = vpop.permute.xlu0 %346
      %v348 = vlaneseq
      %v349 = vshrl.u32 %v348, 7
      %v350 = vsub.s32 4, %v349
      %v351 = vrot.slane %v122, %v350
      %353 = vbcast.lane.b32.xlu0 %v351, 256
      %v354 = vpop.permute.xlu0 %353
      %s356 = sor.u32 256, 8
      %357 = vbcast.lane.b32.xlu0 %v351, %s356
      %v358 = vpop.permute.xlu0 %357
      %v359 = vlaneseq
      %v360 = vshrl.u32 %v359, 7
      %v361 = vsub.s32 5, %v360
      %v362 = vrot.slane %v122, %v361
      %364 = vbcast.lane.b32.xlu0 %v362, 256
      %v365 = vpop.permute.xlu0 %364
      %s367 = sor.u32 256, 8
      %368 = vbcast.lane.b32.xlu0 %v362, %s367
      %v369 = vpop.permute.xlu0 %368
      %v370 = vlaneseq
      %v371 = vshrl.u32 %v370, 7
      %v372 = vsub.s32 6, %v371
      %v373 = vrot.slane %v122, %v372
      %375 = vbcast.lane.b32.xlu0 %v373, 256
      %v376 = vpop.permute.xlu0 %375
      %s378 = sor.u32 256, 8
      %379 = vbcast.lane.b32.xlu0 %v373, %s378
      %v380 = vpop.permute.xlu0 %379
      %v381 = vlaneseq
      %v382 = vshrl.u32 %v381, 7
      %v383 = vsub.s32 7, %v382
      %v384 = vrot.slane %v122, %v383
      %386 = vbcast.lane.b32.xlu0 %v384, 256
      %v387 = vpop.permute.xlu0 %386
      %s389 = sor.u32 256, 8
      %390 = vbcast.lane.b32.xlu0 %v384, %s389
      %v391 = vpop.permute.xlu0 %390
      %v392 = vlaneseq
      %v393 = vshrl.u32 %v392, 7
      %v394 = vsub.s32 0, %v393
      %v395 = vrot.slane %v123, %v394
      %397 = vbcast.lane.b32.xlu0 %v395, 256
      %v398 = vpop.permute.xlu0 %397
      %s400 = sor.u32 256, 8
      %401 = vbcast.lane.b32.xlu0 %v395, %s400
      %v402 = vpop.permute.xlu0 %401
      %v403 = vlaneseq
      %v404 = vshrl.u32 %v403, 7
      %v405 = vsub.s32 1, %v404
      %v406 = vrot.slane %v123, %v405
      %408 = vbcast.lane.b32.xlu0 %v406, 256
      %v409 = vpop.permute.xlu0 %408
      %s411 = sor.u32 256, 8
      %412 = vbcast.lane.b32.xlu0 %v406, %s411
      %v413 = vpop.permute.xlu0 %412
      %v414 = vlaneseq
      %v415 = vshrl.u32 %v414, 7
      %v416 = vsub.s32 2, %v415
      %v417 = vrot.slane %v123, %v416
      %419 = vbcast.lane.b32.xlu0 %v417, 256
      %v420 = vpop.permute.xlu0 %419
      %s422 = sor.u32 256, 8
      %423 = vbcast.lane.b32.xlu0 %v417, %s422
      %v424 = vpop.permute.xlu0 %423
      %v425 = vlaneseq
      %v426 = vshrl.u32 %v425, 7
      %v427 = vsub.s32 3, %v426
      %v428 = vrot.slane %v123, %v427
      %430 = vbcast.lane.b32.xlu0 %v428, 256
      %v431 = vpop.permute.xlu0 %430
      %s433 = sor.u32 256, 8
      %434 = vbcast.lane.b32.xlu0 %v428, %s433
      %v435 = vpop.permute.xlu0 %434
      %v436 = vlaneseq
      %v437 = vshrl.u32 %v436, 7
      %v438 = vsub.s32 4, %v437
      %v439 = vrot.slane %v123, %v438
      %441 = vbcast.lane.b32.xlu0 %v439, 256
      %v442 = vpop.permute.xlu0 %441
      %s444 = sor.u32 256, 8
      %445 = vbcast.lane.b32.xlu0 %v439, %s444
      %v446 = vpop.permute.xlu0 %445
      %v447 = vlaneseq
      %v448 = vshrl.u32 %v447, 7
      %v449 = vsub.s32 5, %v448
      %v450 = vrot.slane %v123, %v449
      %452 = vbcast.lane.b32.xlu0 %v450, 256
      %v453 = vpop.permute.xlu0 %452
      %s455 = sor.u32 256, 8
      %456 = vbcast.lane.b32.xlu0 %v450, %s455
      %v457 = vpop.permute.xlu0 %456
      %v458 = vlaneseq
      %v459 = vshrl.u32 %v458, 7
      %v460 = vsub.s32 6, %v459
      %v461 = vrot.slane %v123, %v460
      %463 = vbcast.lane.b32.xlu0 %v461, 256
      %v464 = vpop.permute.xlu0 %463
      %s466 = sor.u32 256, 8
      %467 = vbcast.lane.b32.xlu0 %v461, %s466
      %v468 = vpop.permute.xlu0 %467
      %v469 = vlaneseq
      %v470 = vshrl.u32 %v469, 7
      %v471 = vsub.s32 7, %v470
      %v472 = vrot.slane %v123, %v471
      %474 = vbcast.lane.b32.xlu0 %v472, 256
      %v475 = vpop.permute.xlu0 %474
      %s477 = sor.u32 256, 8
      %478 = vbcast.lane.b32.xlu0 %v472, %s477
      %v479 = vpop.permute.xlu0 %478
      %v480 = vlaneseq
      %v481 = vshrl.u32 %v480, 7
      %v482 = vsub.s32 0, %v481
      %v483 = vrot.slane %v124, %v482
      %485 = vbcast.lane.b32.xlu0 %v483, 256
      %v486 = vpop.permute.xlu0 %485
      %s488 = sor.u32 256, 8
      %489 = vbcast.lane.b32.xlu0 %v483, %s488
      %v490 = vpop.permute.xlu0 %489
      %v491 = vlaneseq
      %v492 = vshrl.u32 %v491, 7
      %v493 = vsub.s32 1, %v492
      %v494 = vrot.slane %v124, %v493
      %496 = vbcast.lane.b32.xlu0 %v494, 256
      %v497 = vpop.permute.xlu0 %496
      %s499 = sor.u32 256, 8
      %500 = vbcast.lane.b32.xlu0 %v494, %s499
      %v501 = vpop.permute.xlu0 %500
      %v502 = vlaneseq
      %v503 = vshrl.u32 %v502, 7
      %v504 = vsub.s32 2, %v503
      %v505 = vrot.slane %v124, %v504
      %507 = vbcast.lane.b32.xlu0 %v505, 256
      %v508 = vpop.permute.xlu0 %507
      %s510 = sor.u32 256, 8
      %511 = vbcast.lane.b32.xlu0 %v505, %s510
      %v512 = vpop.permute.xlu0 %511
      %v513 = vlaneseq
      %v514 = vshrl.u32 %v513, 7
      %v515 = vsub.s32 3, %v514
      %v516 = vrot.slane %v124, %v515
      %518 = vbcast.lane.b32.xlu0 %v516, 256
      %v519 = vpop.permute.xlu0 %518
      %s521 = sor.u32 256, 8
      %522 = vbcast.lane.b32.xlu0 %v516, %s521
      %v523 = vpop.permute.xlu0 %522
      %v524 = vlaneseq
      %v525 = vshrl.u32 %v524, 7
      %v526 = vsub.s32 4, %v525
      %v527 = vrot.slane %v124, %v526
      %529 = vbcast.lane.b32.xlu0 %v527, 256
      %v530 = vpop.permute.xlu0 %529
      %s532 = sor.u32 256, 8
      %533 = vbcast.lane.b32.xlu0 %v527, %s532
      %v534 = vpop.permute.xlu0 %533
      %v535 = vlaneseq
      %v536 = vshrl.u32 %v535, 7
      %v537 = vsub.s32 5, %v536
      %v538 = vrot.slane %v124, %v537
      %540 = vbcast.lane.b32.xlu0 %v538, 256
      %v541 = vpop.permute.xlu0 %540
      %s543 = sor.u32 256, 8
      %544 = vbcast.lane.b32.xlu0 %v538, %s543
      %v545 = vpop.permute.xlu0 %544
      %v546 = vlaneseq
      %v547 = vshrl.u32 %v546, 7
      %v548 = vsub.s32 6, %v547
      %v549 = vrot.slane %v124, %v548
      %551 = vbcast.lane.b32.xlu0 %v549, 256
      %v552 = vpop.permute.xlu0 %551
      %s554 = sor.u32 256, 8
      %555 = vbcast.lane.b32.xlu0 %v549, %s554
      %v556 = vpop.permute.xlu0 %555
      %v557 = vlaneseq
      %v558 = vshrl.u32 %v557, 7
      %v559 = vsub.s32 7, %v558
      %v560 = vrot.slane %v124, %v559
      %562 = vbcast.lane.b32.xlu0 %v560, 256
      %v563 = vpop.permute.xlu0 %562
      %s565 = sor.u32 256, 8
      %566 = vbcast.lane.b32.xlu0 %v560, %s565
      %v567 = vpop.permute.xlu0 %566
      %v568 = vlaneseq
      %v569 = vshrl.u32 %v568, 7
      %v570 = vsub.s32 0, %v569
      %v571 = vrot.slane %v125, %v570
      %573 = vbcast.lane.b32.xlu0 %v571, 256
      %v574 = vpop.permute.xlu0 %573
      %s576 = sor.u32 256, 8
      %577 = vbcast.lane.b32.xlu0 %v571, %s576
      %v578 = vpop.permute.xlu0 %577
      %v579 = vlaneseq
      %v580 = vshrl.u32 %v579, 7
      %v581 = vsub.s32 1, %v580
      %v582 = vrot.slane %v125, %v581
      %584 = vbcast.lane.b32.xlu0 %v582, 256
      %v585 = vpop.permute.xlu0 %584
      %s587 = sor.u32 256, 8
      %588 = vbcast.lane.b32.xlu0 %v582, %s587
      %v589 = vpop.permute.xlu0 %588
      %v590 = vlaneseq
      %v591 = vshrl.u32 %v590, 7
      %v592 = vsub.s32 2, %v591
      %v593 = vrot.slane %v125, %v592
      %595 = vbcast.lane.b32.xlu0 %v593, 256
      %v596 = vpop.permute.xlu0 %595
      %s598 = sor.u32 256, 8
      %599 = vbcast.lane.b32.xlu0 %v593, %s598
      %v600 = vpop.permute.xlu0 %599
      %v601 = vlaneseq
      %v602 = vshrl.u32 %v601, 7
      %v603 = vsub.s32 3, %v602
      %v604 = vrot.slane %v125, %v603
      %606 = vbcast.lane.b32.xlu0 %v604, 256
      %v607 = vpop.permute.xlu0 %606
      %s609 = sor.u32 256, 8
      %610 = vbcast.lane.b32.xlu0 %v604, %s609
      %v611 = vpop.permute.xlu0 %610
      %v612 = vlaneseq
      %v613 = vshrl.u32 %v612, 7
      %v614 = vsub.s32 4, %v613
      %v615 = vrot.slane %v125, %v614
      %617 = vbcast.lane.b32.xlu0 %v615, 256
      %v618 = vpop.permute.xlu0 %617
      %s620 = sor.u32 256, 8
      %621 = vbcast.lane.b32.xlu0 %v615, %s620
      %v622 = vpop.permute.xlu0 %621
      %v623 = vlaneseq
      %v624 = vshrl.u32 %v623, 7
      %v625 = vsub.s32 5, %v624
      %v626 = vrot.slane %v125, %v625
      %628 = vbcast.lane.b32.xlu0 %v626, 256
      %v629 = vpop.permute.xlu0 %628
      %s631 = sor.u32 256, 8
      %632 = vbcast.lane.b32.xlu0 %v626, %s631
      %v633 = vpop.permute.xlu0 %632
      %v634 = vlaneseq
      %v635 = vshrl.u32 %v634, 7
      %v636 = vsub.s32 6, %v635
      %v637 = vrot.slane %v125, %v636
      %639 = vbcast.lane.b32.xlu0 %v637, 256
      %v640 = vpop.permute.xlu0 %639
      %s642 = sor.u32 256, 8
      %643 = vbcast.lane.b32.xlu0 %v637, %s642
      %v644 = vpop.permute.xlu0 %643
      %v645 = vlaneseq
      %v646 = vshrl.u32 %v645, 7
      %v647 = vsub.s32 7, %v646
      %v648 = vrot.slane %v125, %v647
      %650 = vbcast.lane.b32.xlu0 %v648, 256
      %v651 = vpop.permute.xlu0 %650
      %s653 = sor.u32 256, 8
      %654 = vbcast.lane.b32.xlu0 %v648, %s653
      %v655 = vpop.permute.xlu0 %654
      %v656 = vlaneseq
      %v657 = vshrl.u32 %v656, 7
      %v658 = vsub.s32 0, %v657
      %v659 = vrot.slane %v126, %v658
      %661 = vbcast.lane.b32.xlu0 %v659, 256
      %v662 = vpop.permute.xlu0 %661
      %s664 = sor.u32 256, 8
      %665 = vbcast.lane.b32.xlu0 %v659, %s664
      %v666 = vpop.permute.xlu0 %665
      %v667 = vlaneseq
      %v668 = vshrl.u32 %v667, 7
      %v669 = vsub.s32 1, %v668
      %v670 = vrot.slane %v126, %v669
      %672 = vbcast.lane.b32.xlu0 %v670, 256
      %v673 = vpop.permute.xlu0 %672
      %s675 = sor.u32 256, 8
      %676 = vbcast.lane.b32.xlu0 %v670, %s675
      %v677 = vpop.permute.xlu0 %676
      %v678 = vlaneseq
      %v679 = vshrl.u32 %v678, 7
      %v680 = vsub.s32 2, %v679
      %v681 = vrot.slane %v126, %v680
      %683 = vbcast.lane.b32.xlu0 %v681, 256
      %v684 = vpop.permute.xlu0 %683
      %s686 = sor.u32 256, 8
      %687 = vbcast.lane.b32.xlu0 %v681, %s686
      %v688 = vpop.permute.xlu0 %687
      %v689 = vlaneseq
      %v690 = vshrl.u32 %v689, 7
      %v691 = vsub.s32 3, %v690
      %v692 = vrot.slane %v126, %v691
      %694 = vbcast.lane.b32.xlu0 %v692, 256
      %v695 = vpop.permute.xlu0 %694
      %s697 = sor.u32 256, 8
      %698 = vbcast.lane.b32.xlu0 %v692, %s697
      %v699 = vpop.permute.xlu0 %698
      %v700 = vlaneseq
      %v701 = vshrl.u32 %v700, 7
      %v702 = vsub.s32 4, %v701
      %v703 = vrot.slane %v126, %v702
      %705 = vbcast.lane.b32.xlu0 %v703, 256
      %v706 = vpop.permute.xlu0 %705
      %s708 = sor.u32 256, 8
      %709 = vbcast.lane.b32.xlu0 %v703, %s708
      %v710 = vpop.permute.xlu0 %709
      %v711 = vlaneseq
      %v712 = vshrl.u32 %v711, 7
      %v713 = vsub.s32 5, %v712
      %v714 = vrot.slane %v126, %v713
      %716 = vbcast.lane.b32.xlu0 %v714, 256
      %v717 = vpop.permute.xlu0 %716
      %s719 = sor.u32 256, 8
      %720 = vbcast.lane.b32.xlu0 %v714, %s719
      %v721 = vpop.permute.xlu0 %720
      %v722 = vlaneseq
      %v723 = vshrl.u32 %v722, 7
      %v724 = vsub.s32 6, %v723
      %v725 = vrot.slane %v126, %v724
      %727 = vbcast.lane.b32.xlu0 %v725, 256
      %v728 = vpop.permute.xlu0 %727
      %s730 = sor.u32 256, 8
      %731 = vbcast.lane.b32.xlu0 %v725, %s730
      %v732 = vpop.permute.xlu0 %731
      %v733 = vlaneseq
      %v734 = vshrl.u32 %v733, 7
      %v735 = vsub.s32 7, %v734
      %v736 = vrot.slane %v126, %v735
      %738 = vbcast.lane.b32.xlu0 %v736, 256
      %v739 = vpop.permute.xlu0 %738
      %s741 = sor.u32 256, 8
      %742 = vbcast.lane.b32.xlu0 %v736, %s741
      %v743 = vpop.permute.xlu0 %742
      %v744 = vlaneseq
      %v745 = vshrl.u32 %v744, 7
      %v746 = vsub.s32 0, %v745
      %v747 = vrot.slane %v127, %v746
      %749 = vbcast.lane.b32.xlu0 %v747, 256
      %v750 = vpop.permute.xlu0 %749
      %s752 = sor.u32 256, 8
      %753 = vbcast.lane.b32.xlu0 %v747, %s752
      %v754 = vpop.permute.xlu0 %753
      %v755 = vlaneseq
      %v756 = vshrl.u32 %v755, 7
      %v757 = vsub.s32 1, %v756
      %v758 = vrot.slane %v127, %v757
      %760 = vbcast.lane.b32.xlu0 %v758, 256
      %v761 = vpop.permute.xlu0 %760
      %s763 = sor.u32 256, 8
      %764 = vbcast.lane.b32.xlu0 %v758, %s763
      %v765 = vpop.permute.xlu0 %764
      %v766 = vlaneseq
      %v767 = vshrl.u32 %v766, 7
      %v768 = vsub.s32 2, %v767
      %v769 = vrot.slane %v127, %v768
      %771 = vbcast.lane.b32.xlu0 %v769, 256
      %v772 = vpop.permute.xlu0 %771
      %s774 = sor.u32 256, 8
      %775 = vbcast.lane.b32.xlu0 %v769, %s774
      %v776 = vpop.permute.xlu0 %775
      %v777 = vlaneseq
      %v778 = vshrl.u32 %v777, 7
      %v779 = vsub.s32 3, %v778
      %v780 = vrot.slane %v127, %v779
      %782 = vbcast.lane.b32.xlu0 %v780, 256
      %v783 = vpop.permute.xlu0 %782
      %s785 = sor.u32 256, 8
      %786 = vbcast.lane.b32.xlu0 %v780, %s785
      %v787 = vpop.permute.xlu0 %786
      %v788 = vlaneseq
      %v789 = vshrl.u32 %v788, 7
      %v790 = vsub.s32 4, %v789
      %v791 = vrot.slane %v127, %v790
      %793 = vbcast.lane.b32.xlu0 %v791, 256
      %v794 = vpop.permute.xlu0 %793
      %s796 = sor.u32 256, 8
      %797 = vbcast.lane.b32.xlu0 %v791, %s796
      %v798 = vpop.permute.xlu0 %797
      %v799 = vlaneseq
      %v800 = vshrl.u32 %v799, 7
      %v801 = vsub.s32 5, %v800
      %v802 = vrot.slane %v127, %v801
      %804 = vbcast.lane.b32.xlu0 %v802, 256
      %v805 = vpop.permute.xlu0 %804
      %s807 = sor.u32 256, 8
      %808 = vbcast.lane.b32.xlu0 %v802, %s807
      %v809 = vpop.permute.xlu0 %808
      %v810 = vlaneseq
      %v811 = vshrl.u32 %v810, 7
      %v812 = vsub.s32 6, %v811
      %v813 = vrot.slane %v127, %v812
      %815 = vbcast.lane.b32.xlu0 %v813, 256
      %v816 = vpop.permute.xlu0 %815
      %s818 = sor.u32 256, 8
      %819 = vbcast.lane.b32.xlu0 %v813, %s818
      %v820 = vpop.permute.xlu0 %819
      %v821 = vlaneseq
      %v822 = vshrl.u32 %v821, 7
      %v823 = vsub.s32 7, %v822
      %v824 = vrot.slane %v127, %v823
      %826 = vbcast.lane.b32.xlu0 %v824, 256
      %v827 = vpop.permute.xlu0 %826
      %s829 = sor.u32 256, 8
      %830 = vbcast.lane.b32.xlu0 %v824, %s829
      %v831 = vpop.permute.xlu0 %830
      %v832 = vcombine.low %v134, %v156
      %v833 = vcombine.high %v134, %v156
      %v835 = vunpack.c.l.s4 1983009808
      %v836 = vunpack.c.0.s8 %v835
      %v837 = vlaneseq
      %v838 = vshrl.u32 %v837, 7
      %v839 = vsub.s32 %v836, %v838
      %v840 = vrot.slane %v832, %v839
      %v842 = vunpack.c.l.s4 1983009808
      %v843 = vunpack.c.0.s8 %v842
      %v844 = vlaneseq
      %v845 = vshrl.u32 %v844, 7
      %v846 = vsub.s32 %v843, %v845
      %v847 = vrot.slane %v833, %v846
      %v848 = vcombine.low %v145, %v167
      %v849 = vcombine.high %v145, %v167
      %v851 = vunpack.c.l.s4 1983009808
      %v852 = vunpack.c.0.s8 %v851
      %v853 = vlaneseq
      %v854 = vshrl.u32 %v853, 7
      %v855 = vsub.s32 %v852, %v854
      %v856 = vrot.slane %v848, %v855
      %v858 = vunpack.c.l.s4 1983009808
      %v859 = vunpack.c.0.s8 %v858
      %v860 = vlaneseq
      %v861 = vshrl.u32 %v860, 7
      %v862 = vsub.s32 %v859, %v861
      %v863 = vrot.slane %v849, %v862
      %v864 = vcombine.low %v178, %v200
      %v865 = vcombine.high %v178, %v200
      %v867 = vunpack.c.l.s4 1983009808
      %v868 = vunpack.c.0.s8 %v867
      %v869 = vlaneseq
      %v870 = vshrl.u32 %v869, 7
      %v871 = vsub.s32 %v868, %v870
      %v872 = vrot.slane %v864, %v871
      %v874 = vunpack.c.l.s4 1983009808
      %v875 = vunpack.c.0.s8 %v874
      %v876 = vlaneseq
      %v877 = vshrl.u32 %v876, 7
      %v878 = vsub.s32 %v875, %v877
      %v879 = vrot.slane %v865, %v878
      %v880 = vcombine.low %v189, %v211
      %v881 = vcombine.high %v189, %v211
      %v883 = vunpack.c.l.s4 1983009808
      %v884 = vunpack.c.0.s8 %v883
      %v885 = vlaneseq
      %v886 = vshrl.u32 %v885, 7
      %v887 = vsub.s32 %v884, %v886
      %v888 = vrot.slane %v880, %v887
      %v890 = vunpack.c.l.s4 1983009808
      %v891 = vunpack.c.0.s8 %v890
      %v892 = vlaneseq
      %v893 = vshrl.u32 %v892, 7
      %v894 = vsub.s32 %v891, %v893
      %v895 = vrot.slane %v881, %v894
      %v896 = vcombine.low %v840, %v856
      %v897 = vcombine.high %v840, %v856
      %v899 = vunpack.c.l.s4 1934713408
      %v900 = vunpack.c.0.s8 %v899
      %v901 = vlaneseq
      %v902 = vshrl.u32 %v901, 7
      %v903 = vsub.s32 %v900, %v902
      %v904 = vrot.slane %v896, %v903
      %v906 = vunpack.c.l.s4 1934713408
      %v907 = vunpack.c.0.s8 %v906
      %v908 = vlaneseq
      %v909 = vshrl.u32 %v908, 7
      %v910 = vsub.s32 %v907, %v909
      %v911 = vrot.slane %v897, %v910
      %v912 = vcombine.low %v847, %v863
      %v913 = vcombine.high %v847, %v863
      %v915 = vunpack.c.l.s4 1934713408
      %v916 = vunpack.c.0.s8 %v915
      %v917 = vlaneseq
      %v918 = vshrl.u32 %v917, 7
      %v919 = vsub.s32 %v916, %v918
      %v920 = vrot.slane %v912, %v919
      %v922 = vunpack.c.l.s4 1934713408
      %v923 = vunpack.c.0.s8 %v922
      %v924 = vlaneseq
      %v925 = vshrl.u32 %v924, 7
      %v926 = vsub.s32 %v923, %v925
      %v927 = vrot.slane %v913, %v926
      %v928 = vcombine.low %v872, %v888
      %v929 = vcombine.high %v872, %v888
      %v931 = vunpack.c.l.s4 1934713408
      %v932 = vunpack.c.0.s8 %v931
      %v933 = vlaneseq
      %v934 = vshrl.u32 %v933, 7
      %v935 = vsub.s32 %v932, %v934
      %v936 = vrot.slane %v928, %v935
      %v938 = vunpack.c.l.s4 1934713408
      %v939 = vunpack.c.0.s8 %v938
      %v940 = vlaneseq
      %v941 = vshrl.u32 %v940, 7
      %v942 = vsub.s32 %v939, %v941
      %v943 = vrot.slane %v929, %v942
      %v944 = vcombine.low %v879, %v895
      %v945 = vcombine.high %v879, %v895
      %v947 = vunpack.c.l.s4 1934713408
      %v948 = vunpack.c.0.s8 %v947
      %v949 = vlaneseq
      %v950 = vshrl.u32 %v949, 7
      %v951 = vsub.s32 %v948, %v950
      %v952 = vrot.slane %v944, %v951
      %v954 = vunpack.c.l.s4 1934713408
      %v955 = vunpack.c.0.s8 %v954
      %v956 = vlaneseq
      %v957 = vshrl.u32 %v956, 7
      %v958 = vsub.s32 %v955, %v957
      %v959 = vrot.slane %v945, %v958
      %v960 = vcombine.low %v904, %v936
      %v961 = vcombine.high %v904, %v936
      %v962 = vcombine.low %v911, %v943
      %v963 = vcombine.high %v911, %v943
      %v964 = vcombine.low %v920, %v952
      %v965 = vcombine.high %v920, %v952
      %v966 = vcombine.low %v927, %v959
      %v967 = vcombine.high %v927, %v959
      %v968 = vcombine.low %v222, %v244
      %v969 = vcombine.high %v222, %v244
      %v971 = vunpack.c.l.s4 1983009808
      %v972 = vunpack.c.0.s8 %v971
      %v973 = vlaneseq
      %v974 = vshrl.u32 %v973, 7
      %v975 = vsub.s32 %v972, %v974
      %v976 = vrot.slane %v968, %v975
      %v978 = vunpack.c.l.s4 1983009808
      %v979 = vunpack.c.0.s8 %v978
      %v980 = vlaneseq
      %v981 = vshrl.u32 %v980, 7
      %v982 = vsub.s32 %v979, %v981
      %v983 = vrot.slane %v969, %v982
      %v984 = vcombine.low %v233, %v255
      %v985 = vcombine.high %v233, %v255
      %v987 = vunpack.c.l.s4 1983009808
      %v988 = vunpack.c.0.s8 %v987
      %v989 = vlaneseq
      %v990 = vshrl.u32 %v989, 7
      %v991 = vsub.s32 %v988, %v990
      %v992 = vrot.slane %v984, %v991
      %v994 = vunpack.c.l.s4 1983009808
      %v995 = vunpack.c.0.s8 %v994
      %v996 = vlaneseq
      %v997 = vshrl.u32 %v996, 7
      %v998 = vsub.s32 %v995, %v997
      %v999 = vrot.slane %v985, %v998
      %v1000 = vcombine.low %v266, %v288
      %v1001 = vcombine.high %v266, %v288
      %v1003 = vunpack.c.l.s4 1983009808
      %v1004 = vunpack.c.0.s8 %v1003
      %v1005 = vlaneseq
      %v1006 = vshrl.u32 %v1005, 7
      %v1007 = vsub.s32 %v1004, %v1006
      %v1008 = vrot.slane %v1000, %v1007
      %v1010 = vunpack.c.l.s4 1983009808
      %v1011 = vunpack.c.0.s8 %v1010
      %v1012 = vlaneseq
      %v1013 = vshrl.u32 %v1012, 7
      %v1014 = vsub.s32 %v1011, %v1013
      %v1015 = vrot.slane %v1001, %v1014
      %v1016 = vcombine.low %v277, %v299
      %v1017 = vcombine.high %v277, %v299
      %v1019 = vunpack.c.l.s4 1983009808
      %v1020 = vunpack.c.0.s8 %v1019
      %v1021 = vlaneseq
      %v1022 = vshrl.u32 %v1021, 7
      %v1023 = vsub.s32 %v1020, %v1022
      %v1024 = vrot.slane %v1016, %v1023
      %v1026 = vunpack.c.l.s4 1983009808
      %v1027 = vunpack.c.0.s8 %v1026
      %v1028 = vlaneseq
      %v1029 = vshrl.u32 %v1028, 7
      %v1030 = vsub.s32 %v1027, %v1029
      %v1031 = vrot.slane %v1017, %v1030
      %v1032 = vcombine.low %v976, %v992
      %v1033 = vcombine.high %v976, %v992
      %v1035 = vunpack.c.l.s4 1934713408
      %v1036 = vunpack.c.0.s8 %v1035
      %v1037 = vlaneseq
      %v1038 = vshrl.u32 %v1037, 7
      %v1039 = vsub.s32 %v1036, %v1038
      %v1040 = vrot.slane %v1032, %v1039
      %v1042 = vunpack.c.l.s4 1934713408
      %v1043 = vunpack.c.0.s8 %v1042
      %v1044 = vlaneseq
      %v1045 = vshrl.u32 %v1044, 7
      %v1046 = vsub.s32 %v1043, %v1045
      %v1047 = vrot.slane %v1033, %v1046
      %v1048 = vcombine.low %v983, %v999
      %v1049 = vcombine.high %v983, %v999
      %v1051 = vunpack.c.l.s4 1934713408
      %v1052 = vunpack.c.0.s8 %v1051
      %v1053 = vlaneseq
      %v1054 = vshrl.u32 %v1053, 7
      %v1055 = vsub.s32 %v1052, %v1054
      %v1056 = vrot.slane %v1048, %v1055
      %v1058 = vunpack.c.l.s4 1934713408
      %v1059 = vunpack.c.0.s8 %v1058
      %v1060 = vlaneseq
      %v1061 = vshrl.u32 %v1060, 7
      %v1062 = vsub.s32 %v1059, %v1061
      %v1063 = vrot.slane %v1049, %v1062
      %v1064 = vcombine.low %v1008, %v1024
      %v1065 = vcombine.high %v1008, %v1024
      %v1067 = vunpack.c.l.s4 1934713408
      %v1068 = vunpack.c.0.s8 %v1067
      %v1069 = vlaneseq
      %v1070 = vshrl.u32 %v1069, 7
      %v1071 = vsub.s32 %v1068, %v1070
      %v1072 = vrot.slane %v1064, %v1071
      %v1074 = vunpack.c.l.s4 1934713408
      %v1075 = vunpack.c.0.s8 %v1074
      %v1076 = vlaneseq
      %v1077 = vshrl.u32 %v1076, 7
      %v1078 = vsub.s32 %v1075, %v1077
      %v1079 = vrot.slane %v1065, %v1078
      %v1080 = vcombine.low %v1015, %v1031
      %v1081 = vcombine.high %v1015, %v1031
      %v1083 = vunpack.c.l.s4 1934713408
      %v1084 = vunpack.c.0.s8 %v1083
      %v1085 = vlaneseq
      %v1086 = vshrl.u32 %v1085, 7
      %v1087 = vsub.s32 %v1084, %v1086
      %v1088 = vrot.slane %v1080, %v1087
      %v1090 = vunpack.c.l.s4 1934713408
      %v1091 = vunpack.c.0.s8 %v1090
      %v1092 = vlaneseq
      %v1093 = vshrl.u32 %v1092, 7
      %v1094 = vsub.s32 %v1091, %v1093
      %v1095 = vrot.slane %v1081, %v1094
      %v1096 = vcombine.low %v1040, %v1072
      %v1097 = vcombine.high %v1040, %v1072
      %v1098 = vcombine.low %v1047, %v1079
      %v1099 = vcombine.high %v1047, %v1079
      %v1100 = vcombine.low %v1056, %v1088
      %v1101 = vcombine.high %v1056, %v1088
      %v1102 = vcombine.low %v1063, %v1095
      %v1103 = vcombine.high %v1063, %v1095
      %v1104 = vcombine.low %v310, %v332
      %v1105 = vcombine.high %v310, %v332
      %v1107 = vunpack.c.l.s4 1983009808
      %v1108 = vunpack.c.0.s8 %v1107
      %v1109 = vlaneseq
      %v1110 = vshrl.u32 %v1109, 7
      %v1111 = vsub.s32 %v1108, %v1110
      %v1112 = vrot.slane %v1104, %v1111
      %v1114 = vunpack.c.l.s4 1983009808
      %v1115 = vunpack.c.0.s8 %v1114
      %v1116 = vlaneseq
      %v1117 = vshrl.u32 %v1116, 7
      %v1118 = vsub.s32 %v1115, %v1117
      %v1119 = vrot.slane %v1105, %v1118
      %v1120 = vcombine.low %v321, %v343
      %v1121 = vcombine.high %v321, %v343
      %v1123 = vunpack.c.l.s4 1983009808
      %v1124 = vunpack.c.0.s8 %v1123
      %v1125 = vlaneseq
      %v1126 = vshrl.u32 %v1125, 7
      %v1127 = vsub.s32 %v1124, %v1126
      %v1128 = vrot.slane %v1120, %v1127
      %v1130 = vunpack.c.l.s4 1983009808
      %v1131 = vunpack.c.0.s8 %v1130
      %v1132 = vlaneseq
      %v1133 = vshrl.u32 %v1132, 7
      %v1134 = vsub.s32 %v1131, %v1133
      %v1135 = vrot.slane %v1121, %v1134
      %v1136 = vcombine.low %v354, %v376
      %v1137 = vcombine.high %v354, %v376
      %v1139 = vunpack.c.l.s4 1983009808
      %v1140 = vunpack.c.0.s8 %v1139
      %v1141 = vlaneseq
      %v1142 = vshrl.u32 %v1141, 7
      %v1143 = vsub.s32 %v1140, %v1142
      %v1144 = vrot.slane %v1136, %v1143
      %v1146 = vunpack.c.l.s4 1983009808
      %v1147 = vunpack.c.0.s8 %v1146
      %v1148 = vlaneseq
      %v1149 = vshrl.u32 %v1148, 7
      %v1150 = vsub.s32 %v1147, %v1149
      %v1151 = vrot.slane %v1137, %v1150
      %v1152 = vcombine.low %v365, %v387
      %v1153 = vcombine.high %v365, %v387
      %v1155 = vunpack.c.l.s4 1983009808
      %v1156 = vunpack.c.0.s8 %v1155
      %v1157 = vlaneseq
      %v1158 = vshrl.u32 %v1157, 7
      %v1159 = vsub.s32 %v1156, %v1158
      %v1160 = vrot.slane %v1152, %v1159
      %v1162 = vunpack.c.l.s4 1983009808
      %v1163 = vunpack.c.0.s8 %v1162
      %v1164 = vlaneseq
      %v1165 = vshrl.u32 %v1164, 7
      %v1166 = vsub.s32 %v1163, %v1165
      %v1167 = vrot.slane %v1153, %v1166
      %v1168 = vcombine.low %v1112, %v1128
      %v1169 = vcombine.high %v1112, %v1128
      %v1171 = vunpack.c.l.s4 1934713408
      %v1172 = vunpack.c.0.s8 %v1171
      %v1173 = vlaneseq
      %v1174 = vshrl.u32 %v1173, 7
      %v1175 = vsub.s32 %v1172, %v1174
      %v1176 = vrot.slane %v1168, %v1175
      %v1178 = vunpack.c.l.s4 1934713408
      %v1179 = vunpack.c.0.s8 %v1178
      %v1180 = vlaneseq
      %v1181 = vshrl.u32 %v1180, 7
      %v1182 = vsub.s32 %v1179, %v1181
      %v1183 = vrot.slane %v1169, %v1182
      %v1184 = vcombine.low %v1119, %v1135
      %v1185 = vcombine.high %v1119, %v1135
      %v1187 = vunpack.c.l.s4 1934713408
      %v1188 = vunpack.c.0.s8 %v1187
      %v1189 = vlaneseq
      %v1190 = vshrl.u32 %v1189, 7
      %v1191 = vsub.s32 %v1188, %v1190
      %v1192 = vrot.slane %v1184, %v1191
      %v1194 = vunpack.c.l.s4 1934713408
      %v1195 = vunpack.c.0.s8 %v1194
      %v1196 = vlaneseq
      %v1197 = vshrl.u32 %v1196, 7
      %v1198 = vsub.s32 %v1195, %v1197
      %v1199 = vrot.slane %v1185, %v1198
      %v1200 = vcombine.low %v1144, %v1160
      %v1201 = vcombine.high %v1144, %v1160
      %v1203 = vunpack.c.l.s4 1934713408
      %v1204 = vunpack.c.0.s8 %v1203
      %v1205 = vlaneseq
      %v1206 = vshrl.u32 %v1205, 7
      %v1207 = vsub.s32 %v1204, %v1206
      %v1208 = vrot.slane %v1200, %v1207
      %v1210 = vunpack.c.l.s4 1934713408
      %v1211 = vunpack.c.0.s8 %v1210
      %v1212 = vlaneseq
      %v1213 = vshrl.u32 %v1212, 7
      %v1214 = vsub.s32 %v1211, %v1213
      %v1215 = vrot.slane %v1201, %v1214
      %v1216 = vcombine.low %v1151, %v1167
      %v1217 = vcombine.high %v1151, %v1167
      %v1219 = vunpack.c.l.s4 1934713408
      %v1220 = vunpack.c.0.s8 %v1219
      %v1221 = vlaneseq
      %v1222 = vshrl.u32 %v1221, 7
      %v1223 = vsub.s32 %v1220, %v1222
      %v1224 = vrot.slane %v1216, %v1223
      %v1226 = vunpack.c.l.s4 1934713408
      %v1227 = vunpack.c.0.s8 %v1226
      %v1228 = vlaneseq
      %v1229 = vshrl.u32 %v1228, 7
      %v1230 = vsub.s32 %v1227, %v1229
      %v1231 = vrot.slane %v1217, %v1230
      %v1232 = vcombine.low %v1176, %v1208
      %v1233 = vcombine.high %v1176, %v1208
      %v1234 = vcombine.low %v1183, %v1215
      %v1235 = vcombine.high %v1183, %v1215
      %v1236 = vcombine.low %v1192, %v1224
      %v1237 = vcombine.high %v1192, %v1224
      %v1238 = vcombine.low %v1199, %v1231
      %v1239 = vcombine.high %v1199, %v1231
      %v1240 = vcombine.low %v398, %v420
      %v1241 = vcombine.high %v398, %v420
      %v1243 = vunpack.c.l.s4 1983009808
      %v1244 = vunpack.c.0.s8 %v1243
      %v1245 = vlaneseq
      %v1246 = vshrl.u32 %v1245, 7
      %v1247 = vsub.s32 %v1244, %v1246
      %v1248 = vrot.slane %v1240, %v1247
      %v1250 = vunpack.c.l.s4 1983009808
      %v1251 = vunpack.c.0.s8 %v1250
      %v1252 = vlaneseq
      %v1253 = vshrl.u32 %v1252, 7
      %v1254 = vsub.s32 %v1251, %v1253
      %v1255 = vrot.slane %v1241, %v1254
      %v1256 = vcombine.low %v409, %v431
      %v1257 = vcombine.high %v409, %v431
      %v1259 = vunpack.c.l.s4 1983009808
      %v1260 = vunpack.c.0.s8 %v1259
      %v1261 = vlaneseq
      %v1262 = vshrl.u32 %v1261, 7
      %v1263 = vsub.s32 %v1260, %v1262
      %v1264 = vrot.slane %v1256, %v1263
      %v1266 = vunpack.c.l.s4 1983009808
      %v1267 = vunpack.c.0.s8 %v1266
      %v1268 = vlaneseq
      %v1269 = vshrl.u32 %v1268, 7
      %v1270 = vsub.s32 %v1267, %v1269
      %v1271 = vrot.slane %v1257, %v1270
      %v1272 = vcombine.low %v442, %v464
      %v1273 = vcombine.high %v442, %v464
      %v1275 = vunpack.c.l.s4 1983009808
      %v1276 = vunpack.c.0.s8 %v1275
      %v1277 = vlaneseq
      %v1278 = vshrl.u32 %v1277, 7
      %v1279 = vsub.s32 %v1276, %v1278
      %v1280 = vrot.slane %v1272, %v1279
      %v1282 = vunpack.c.l.s4 1983009808
      %v1283 = vunpack.c.0.s8 %v1282
      %v1284 = vlaneseq
      %v1285 = vshrl.u32 %v1284, 7
      %v1286 = vsub.s32 %v1283, %v1285
      %v1287 = vrot.slane %v1273, %v1286
      %v1288 = vcombine.low %v453, %v475
      %v1289 = vcombine.high %v453, %v475
      %v1291 = vunpack.c.l.s4 1983009808
      %v1292 = vunpack.c.0.s8 %v1291
      %v1293 = vlaneseq
      %v1294 = vshrl.u32 %v1293, 7
      %v1295 = vsub.s32 %v1292, %v1294
      %v1296 = vrot.slane %v1288, %v1295
      %v1298 = vunpack.c.l.s4 1983009808
      %v1299 = vunpack.c.0.s8 %v1298
      %v1300 = vlaneseq
      %v1301 = vshrl.u32 %v1300, 7
      %v1302 = vsub.s32 %v1299, %v1301
      %v1303 = vrot.slane %v1289, %v1302
      %v1304 = vcombine.low %v1248, %v1264
      %v1305 = vcombine.high %v1248, %v1264
      %v1307 = vunpack.c.l.s4 1934713408
      %v1308 = vunpack.c.0.s8 %v1307
      %v1309 = vlaneseq
      %v1310 = vshrl.u32 %v1309, 7
      %v1311 = vsub.s32 %v1308, %v1310
      %v1312 = vrot.slane %v1304, %v1311
      %v1314 = vunpack.c.l.s4 1934713408
      %v1315 = vunpack.c.0.s8 %v1314
      %v1316 = vlaneseq
      %v1317 = vshrl.u32 %v1316, 7
      %v1318 = vsub.s32 %v1315, %v1317
      %v1319 = vrot.slane %v1305, %v1318
      %v1320 = vcombine.low %v1255, %v1271
      %v1321 = vcombine.high %v1255, %v1271
      %v1323 = vunpack.c.l.s4 1934713408
      %v1324 = vunpack.c.0.s8 %v1323
      %v1325 = vlaneseq
      %v1326 = vshrl.u32 %v1325, 7
      %v1327 = vsub.s32 %v1324, %v1326
      %v1328 = vrot.slane %v1320, %v1327
      %v1330 = vunpack.c.l.s4 1934713408
      %v1331 = vunpack.c.0.s8 %v1330
      %v1332 = vlaneseq
      %v1333 = vshrl.u32 %v1332, 7
      %v1334 = vsub.s32 %v1331, %v1333
      %v1335 = vrot.slane %v1321, %v1334
      %v1336 = vcombine.low %v1280, %v1296
      %v1337 = vcombine.high %v1280, %v1296
      %v1339 = vunpack.c.l.s4 1934713408
      %v1340 = vunpack.c.0.s8 %v1339
      %v1341 = vlaneseq
      %v1342 = vshrl.u32 %v1341, 7
      %v1343 = vsub.s32 %v1340, %v1342
      %v1344 = vrot.slane %v1336, %v1343
      %v1346 = vunpack.c.l.s4 1934713408
      %v1347 = vunpack.c.0.s8 %v1346
      %v1348 = vlaneseq
      %v1349 = vshrl.u32 %v1348, 7
      %v1350 = vsub.s32 %v1347, %v1349
      %v1351 = vrot.slane %v1337, %v1350
      %v1352 = vcombine.low %v1287, %v1303
      %v1353 = vcombine.high %v1287, %v1303
      %v1355 = vunpack.c.l.s4 1934713408
      %v1356 = vunpack.c.0.s8 %v1355
      %v1357 = vlaneseq
      %v1358 = vshrl.u32 %v1357, 7
      %v1359 = vsub.s32 %v1356, %v1358
      %v1360 = vrot.slane %v1352, %v1359
      %v1362 = vunpack.c.l.s4 1934713408
      %v1363 = vunpack.c.0.s8 %v1362
      %v1364 = vlaneseq
      %v1365 = vshrl.u32 %v1364, 7
      %v1366 = vsub.s32 %v1363, %v1365
      %v1367 = vrot.slane %v1353, %v1366
      %v1368 = vcombine.low %v1312, %v1344
      %v1369 = vcombine.high %v1312, %v1344
      %v1370 = vcombine.low %v1319, %v1351
      %v1371 = vcombine.high %v1319, %v1351
      %v1372 = vcombine.low %v1328, %v1360
      %v1373 = vcombine.high %v1328, %v1360
      %v1374 = vcombine.low %v1335, %v1367
      %v1375 = vcombine.high %v1335, %v1367
      %v1376 = vcombine.low %v486, %v508
      %v1377 = vcombine.high %v486, %v508
      %v1379 = vunpack.c.l.s4 1983009808
      %v1380 = vunpack.c.0.s8 %v1379
      %v1381 = vlaneseq
      %v1382 = vshrl.u32 %v1381, 7
      %v1383 = vsub.s32 %v1380, %v1382
      %v1384 = vrot.slane %v1376, %v1383
      %v1386 = vunpack.c.l.s4 1983009808
      %v1387 = vunpack.c.0.s8 %v1386
      %v1388 = vlaneseq
      %v1389 = vshrl.u32 %v1388, 7
      %v1390 = vsub.s32 %v1387, %v1389
      %v1391 = vrot.slane %v1377, %v1390
      %v1392 = vcombine.low %v497, %v519
      %v1393 = vcombine.high %v497, %v519
      %v1395 = vunpack.c.l.s4 1983009808
      %v1396 = vunpack.c.0.s8 %v1395
      %v1397 = vlaneseq
      %v1398 = vshrl.u32 %v1397, 7
      %v1399 = vsub.s32 %v1396, %v1398
      %v1400 = vrot.slane %v1392, %v1399
      %v1402 = vunpack.c.l.s4 1983009808
      %v1403 = vunpack.c.0.s8 %v1402
      %v1404 = vlaneseq
      %v1405 = vshrl.u32 %v1404, 7
      %v1406 = vsub.s32 %v1403, %v1405
      %v1407 = vrot.slane %v1393, %v1406
      %v1408 = vcombine.low %v530, %v552
      %v1409 = vcombine.high %v530, %v552
      %v1411 = vunpack.c.l.s4 1983009808
      %v1412 = vunpack.c.0.s8 %v1411
      %v1413 = vlaneseq
      %v1414 = vshrl.u32 %v1413, 7
      %v1415 = vsub.s32 %v1412, %v1414
      %v1416 = vrot.slane %v1408, %v1415
      %v1418 = vunpack.c.l.s4 1983009808
      %v1419 = vunpack.c.0.s8 %v1418
      %v1420 = vlaneseq
      %v1421 = vshrl.u32 %v1420, 7
      %v1422 = vsub.s32 %v1419, %v1421
      %v1423 = vrot.slane %v1409, %v1422
      %v1424 = vcombine.low %v541, %v563
      %v1425 = vcombine.high %v541, %v563
      %v1427 = vunpack.c.l.s4 1983009808
      %v1428 = vunpack.c.0.s8 %v1427
      %v1429 = vlaneseq
      %v1430 = vshrl.u32 %v1429, 7
      %v1431 = vsub.s32 %v1428, %v1430
      %v1432 = vrot.slane %v1424, %v1431
      %v1434 = vunpack.c.l.s4 1983009808
      %v1435 = vunpack.c.0.s8 %v1434
      %v1436 = vlaneseq
      %v1437 = vshrl.u32 %v1436, 7
      %v1438 = vsub.s32 %v1435, %v1437
      %v1439 = vrot.slane %v1425, %v1438
      %v1440 = vcombine.low %v1384, %v1400
      %v1441 = vcombine.high %v1384, %v1400
      %v1443 = vunpack.c.l.s4 1934713408
      %v1444 = vunpack.c.0.s8 %v1443
      %v1445 = vlaneseq
      %v1446 = vshrl.u32 %v1445, 7
      %v1447 = vsub.s32 %v1444, %v1446
      %v1448 = vrot.slane %v1440, %v1447
      %v1450 = vunpack.c.l.s4 1934713408
      %v1451 = vunpack.c.0.s8 %v1450
      %v1452 = vlaneseq
      %v1453 = vshrl.u32 %v1452, 7
      %v1454 = vsub.s32 %v1451, %v1453
      %v1455 = vrot.slane %v1441, %v1454
      %v1456 = vcombine.low %v1391, %v1407
      %v1457 = vcombine.high %v1391, %v1407
      %v1459 = vunpack.c.l.s4 1934713408
      %v1460 = vunpack.c.0.s8 %v1459
      %v1461 = vlaneseq
      %v1462 = vshrl.u32 %v1461, 7
      %v1463 = vsub.s32 %v1460, %v1462
      %v1464 = vrot.slane %v1456, %v1463
      %v1466 = vunpack.c.l.s4 1934713408
      %v1467 = vunpack.c.0.s8 %v1466
      %v1468 = vlaneseq
      %v1469 = vshrl.u32 %v1468, 7
      %v1470 = vsub.s32 %v1467, %v1469
      %v1471 = vrot.slane %v1457, %v1470
      %v1472 = vcombine.low %v1416, %v1432
      %v1473 = vcombine.high %v1416, %v1432
      %v1475 = vunpack.c.l.s4 1934713408
      %v1476 = vunpack.c.0.s8 %v1475
      %v1477 = vlaneseq
      %v1478 = vshrl.u32 %v1477, 7
      %v1479 = vsub.s32 %v1476, %v1478
      %v1480 = vrot.slane %v1472, %v1479
      %v1482 = vunpack.c.l.s4 1934713408
      %v1483 = vunpack.c.0.s8 %v1482
      %v1484 = vlaneseq
      %v1485 = vshrl.u32 %v1484, 7
      %v1486 = vsub.s32 %v1483, %v1485
      %v1487 = vrot.slane %v1473, %v1486
      %v1488 = vcombine.low %v1423, %v1439
      %v1489 = vcombine.high %v1423, %v1439
      %v1491 = vunpack.c.l.s4 1934713408
      %v1492 = vunpack.c.0.s8 %v1491
      %v1493 = vlaneseq
      %v1494 = vshrl.u32 %v1493, 7
      %v1495 = vsub.s32 %v1492, %v1494
      %v1496 = vrot.slane %v1488, %v1495
      %v1498 = vunpack.c.l.s4 1934713408
      %v1499 = vunpack.c.0.s8 %v1498
      %v1500 = vlaneseq
      %v1501 = vshrl.u32 %v1500, 7
      %v1502 = vsub.s32 %v1499, %v1501
      %v1503 = vrot.slane %v1489, %v1502
      %v1504 = vcombine.low %v1448, %v1480
      %v1505 = vcombine.high %v1448, %v1480
      %v1506 = vcombine.low %v1455, %v1487
      %v1507 = vcombine.high %v1455, %v1487
      %v1508 = vcombine.low %v1464, %v1496
      %v1509 = vcombine.high %v1464, %v1496
      %v1510 = vcombine.low %v1471, %v1503
      %v1511 = vcombine.high %v1471, %v1503
      %v1512 = vcombine.low %v574, %v596
      %v1513 = vcombine.high %v574, %v596
      %v1515 = vunpack.c.l.s4 1983009808
      %v1516 = vunpack.c.0.s8 %v1515
      %v1517 = vlaneseq
      %v1518 = vshrl.u32 %v1517, 7
      %v1519 = vsub.s32 %v1516, %v1518
      %v1520 = vrot.slane %v1512, %v1519
      %v1522 = vunpack.c.l.s4 1983009808
      %v1523 = vunpack.c.0.s8 %v1522
      %v1524 = vlaneseq
      %v1525 = vshrl.u32 %v1524, 7
      %v1526 = vsub.s32 %v1523, %v1525
      %v1527 = vrot.slane %v1513, %v1526
      %v1528 = vcombine.low %v585, %v607
      %v1529 = vcombine.high %v585, %v607
      %v1531 = vunpack.c.l.s4 1983009808
      %v1532 = vunpack.c.0.s8 %v1531
      %v1533 = vlaneseq
      %v1534 = vshrl.u32 %v1533, 7
      %v1535 = vsub.s32 %v1532, %v1534
      %v1536 = vrot.slane %v1528, %v1535
      %v1538 = vunpack.c.l.s4 1983009808
      %v1539 = vunpack.c.0.s8 %v1538
      %v1540 = vlaneseq
      %v1541 = vshrl.u32 %v1540, 7
      %v1542 = vsub.s32 %v1539, %v1541
      %v1543 = vrot.slane %v1529, %v1542
      %v1544 = vcombine.low %v618, %v640
      %v1545 = vcombine.high %v618, %v640
      %v1547 = vunpack.c.l.s4 1983009808
      %v1548 = vunpack.c.0.s8 %v1547
      %v1549 = vlaneseq
      %v1550 = vshrl.u32 %v1549, 7
      %v1551 = vsub.s32 %v1548, %v1550
      %v1552 = vrot.slane %v1544, %v1551
      %v1554 = vunpack.c.l.s4 1983009808
      %v1555 = vunpack.c.0.s8 %v1554
      %v1556 = vlaneseq
      %v1557 = vshrl.u32 %v1556, 7
      %v1558 = vsub.s32 %v1555, %v1557
      %v1559 = vrot.slane %v1545, %v1558
      %v1560 = vcombine.low %v629, %v651
      %v1561 = vcombine.high %v629, %v651
      %v1563 = vunpack.c.l.s4 1983009808
      %v1564 = vunpack.c.0.s8 %v1563
      %v1565 = vlaneseq
      %v1566 = vshrl.u32 %v1565, 7
      %v1567 = vsub.s32 %v1564, %v1566
      %v1568 = vrot.slane %v1560, %v1567
      %v1570 = vunpack.c.l.s4 1983009808
      %v1571 = vunpack.c.0.s8 %v1570
      %v1572 = vlaneseq
      %v1573 = vshrl.u32 %v1572, 7
      %v1574 = vsub.s32 %v1571, %v1573
      %v1575 = vrot.slane %v1561, %v1574
      %v1576 = vcombine.low %v1520, %v1536
      %v1577 = vcombine.high %v1520, %v1536
      %v1579 = vunpack.c.l.s4 1934713408
      %v1580 = vunpack.c.0.s8 %v1579
      %v1581 = vlaneseq
      %v1582 = vshrl.u32 %v1581, 7
      %v1583 = vsub.s32 %v1580, %v1582
      %v1584 = vrot.slane %v1576, %v1583
      %v1586 = vunpack.c.l.s4 1934713408
      %v1587 = vunpack.c.0.s8 %v1586
      %v1588 = vlaneseq
      %v1589 = vshrl.u32 %v1588, 7
      %v1590 = vsub.s32 %v1587, %v1589
      %v1591 = vrot.slane %v1577, %v1590
      %v1592 = vcombine.low %v1527, %v1543
      %v1593 = vcombine.high %v1527, %v1543
      %v1595 = vunpack.c.l.s4 1934713408
      %v1596 = vunpack.c.0.s8 %v1595
      %v1597 = vlaneseq
      %v1598 = vshrl.u32 %v1597, 7
      %v1599 = vsub.s32 %v1596, %v1598
      %v1600 = vrot.slane %v1592, %v1599
      %v1602 = vunpack.c.l.s4 1934713408
      %v1603 = vunpack.c.0.s8 %v1602
      %v1604 = vlaneseq
      %v1605 = vshrl.u32 %v1604, 7
      %v1606 = vsub.s32 %v1603, %v1605
      %v1607 = vrot.slane %v1593, %v1606
      %v1608 = vcombine.low %v1552, %v1568
      %v1609 = vcombine.high %v1552, %v1568
      %v1611 = vunpack.c.l.s4 1934713408
      %v1612 = vunpack.c.0.s8 %v1611
      %v1613 = vlaneseq
      %v1614 = vshrl.u32 %v1613, 7
      %v1615 = vsub.s32 %v1612, %v1614
      %v1616 = vrot.slane %v1608, %v1615
      %v1618 = vunpack.c.l.s4 1934713408
      %v1619 = vunpack.c.0.s8 %v1618
      %v1620 = vlaneseq
      %v1621 = vshrl.u32 %v1620, 7
      %v1622 = vsub.s32 %v1619, %v1621
      %v1623 = vrot.slane %v1609, %v1622
      %v1624 = vcombine.low %v1559, %v1575
      %v1625 = vcombine.high %v1559, %v1575
      %v1627 = vunpack.c.l.s4 1934713408
      %v1628 = vunpack.c.0.s8 %v1627
      %v1629 = vlaneseq
      %v1630 = vshrl.u32 %v1629, 7
      %v1631 = vsub.s32 %v1628, %v1630
      %v1632 = vrot.slane %v1624, %v1631
      %v1634 = vunpack.c.l.s4 1934713408
      %v1635 = vunpack.c.0.s8 %v1634
      %v1636 = vlaneseq
      %v1637 = vshrl.u32 %v1636, 7
      %v1638 = vsub.s32 %v1635, %v1637
      %v1639 = vrot.slane %v1625, %v1638
      %v1640 = vcombine.low %v1584, %v1616
      %v1641 = vcombine.high %v1584, %v1616
      %v1642 = vcombine.low %v1591, %v1623
      %v1643 = vcombine.high %v1591, %v1623
      %v1644 = vcombine.low %v1600, %v1632
      %v1645 = vcombine.high %v1600, %v1632
      %v1646 = vcombine.low %v1607, %v1639
      %v1647 = vcombine.high %v1607, %v1639
      %v1648 = vcombine.low %v662, %v684
      %v1649 = vcombine.high %v662, %v684
      %v1651 = vunpack.c.l.s4 1983009808
      %v1652 = vunpack.c.0.s8 %v1651
      %v1653 = vlaneseq
      %v1654 = vshrl.u32 %v1653, 7
      %v1655 = vsub.s32 %v1652, %v1654
      %v1656 = vrot.slane %v1648, %v1655
      %v1658 = vunpack.c.l.s4 1983009808
      %v1659 = vunpack.c.0.s8 %v1658
      %v1660 = vlaneseq
      %v1661 = vshrl.u32 %v1660, 7
      %v1662 = vsub.s32 %v1659, %v1661
      %v1663 = vrot.slane %v1649, %v1662
      %v1664 = vcombine.low %v673, %v695
      %v1665 = vcombine.high %v673, %v695
      %v1667 = vunpack.c.l.s4 1983009808
      %v1668 = vunpack.c.0.s8 %v1667
      %v1669 = vlaneseq
      %v1670 = vshrl.u32 %v1669, 7
      %v1671 = vsub.s32 %v1668, %v1670
      %v1672 = vrot.slane %v1664, %v1671
      %v1674 = vunpack.c.l.s4 1983009808
      %v1675 = vunpack.c.0.s8 %v1674
      %v1676 = vlaneseq
      %v1677 = vshrl.u32 %v1676, 7
      %v1678 = vsub.s32 %v1675, %v1677
      %v1679 = vrot.slane %v1665, %v1678
      %v1680 = vcombine.low %v706, %v728
      %v1681 = vcombine.high %v706, %v728
      %v1683 = vunpack.c.l.s4 1983009808
      %v1684 = vunpack.c.0.s8 %v1683
      %v1685 = vlaneseq
      %v1686 = vshrl.u32 %v1685, 7
      %v1687 = vsub.s32 %v1684, %v1686
      %v1688 = vrot.slane %v1680, %v1687
      %v1690 = vunpack.c.l.s4 1983009808
      %v1691 = vunpack.c.0.s8 %v1690
      %v1692 = vlaneseq
      %v1693 = vshrl.u32 %v1692, 7
      %v1694 = vsub.s32 %v1691, %v1693
      %v1695 = vrot.slane %v1681, %v1694
      %v1696 = vcombine.low %v717, %v739
      %v1697 = vcombine.high %v717, %v739
      %v1699 = vunpack.c.l.s4 1983009808
      %v1700 = vunpack.c.0.s8 %v1699
      %v1701 = vlaneseq
      %v1702 = vshrl.u32 %v1701, 7
      %v1703 = vsub.s32 %v1700, %v1702
      %v1704 = vrot.slane %v1696, %v1703
      %v1706 = vunpack.c.l.s4 1983009808
      %v1707 = vunpack.c.0.s8 %v1706
      %v1708 = vlaneseq
      %v1709 = vshrl.u32 %v1708, 7
      %v1710 = vsub.s32 %v1707, %v1709
      %v1711 = vrot.slane %v1697, %v1710
      %v1712 = vcombine.low %v1656, %v1672
      %v1713 = vcombine.high %v1656, %v1672
      %v1715 = vunpack.c.l.s4 1934713408
      %v1716 = vunpack.c.0.s8 %v1715
      %v1717 = vlaneseq
      %v1718 = vshrl.u32 %v1717, 7
      %v1719 = vsub.s32 %v1716, %v1718
      %v1720 = vrot.slane %v1712, %v1719
      %v1722 = vunpack.c.l.s4 1934713408
      %v1723 = vunpack.c.0.s8 %v1722
      %v1724 = vlaneseq
      %v1725 = vshrl.u32 %v1724, 7
      %v1726 = vsub.s32 %v1723, %v1725
      %v1727 = vrot.slane %v1713, %v1726
      %v1728 = vcombine.low %v1663, %v1679
      %v1729 = vcombine.high %v1663, %v1679
      %v1731 = vunpack.c.l.s4 1934713408
      %v1732 = vunpack.c.0.s8 %v1731
      %v1733 = vlaneseq
      %v1734 = vshrl.u32 %v1733, 7
      %v1735 = vsub.s32 %v1732, %v1734
      %v1736 = vrot.slane %v1728, %v1735
      %v1738 = vunpack.c.l.s4 1934713408
      %v1739 = vunpack.c.0.s8 %v1738
      %v1740 = vlaneseq
      %v1741 = vshrl.u32 %v1740, 7
      %v1742 = vsub.s32 %v1739, %v1741
      %v1743 = vrot.slane %v1729, %v1742
      %v1744 = vcombine.low %v1688, %v1704
      %v1745 = vcombine.high %v1688, %v1704
      %v1747 = vunpack.c.l.s4 1934713408
      %v1748 = vunpack.c.0.s8 %v1747
      %v1749 = vlaneseq
      %v1750 = vshrl.u32 %v1749, 7
      %v1751 = vsub.s32 %v1748, %v1750
      %v1752 = vrot.slane %v1744, %v1751
      %v1754 = vunpack.c.l.s4 1934713408
      %v1755 = vunpack.c.0.s8 %v1754
      %v1756 = vlaneseq
      %v1757 = vshrl.u32 %v1756, 7
      %v1758 = vsub.s32 %v1755, %v1757
      %v1759 = vrot.slane %v1745, %v1758
      %v1760 = vcombine.low %v1695, %v1711
      %v1761 = vcombine.high %v1695, %v1711
      %v1763 = vunpack.c.l.s4 1934713408
      %v1764 = vunpack.c.0.s8 %v1763
      %v1765 = vlaneseq
      %v1766 = vshrl.u32 %v1765, 7
      %v1767 = vsub.s32 %v1764, %v1766
      %v1768 = vrot.slane %v1760, %v1767
      %v1770 = vunpack.c.l.s4 1934713408
      %v1771 = vunpack.c.0.s8 %v1770
      %v1772 = vlaneseq
      %v1773 = vshrl.u32 %v1772, 7
      %v1774 = vsub.s32 %v1771, %v1773
      %v1775 = vrot.slane %v1761, %v1774
      %v1776 = vcombine.low %v1720, %v1752
      %v1777 = vcombine.high %v1720, %v1752
      %v1778 = vcombine.low %v1727, %v1759
      %v1779 = vcombine.high %v1727, %v1759
      %v1780 = vcombine.low %v1736, %v1768
      %v1781 = vcombine.high %v1736, %v1768
      %v1782 = vcombine.low %v1743, %v1775
      %v1783 = vcombine.high %v1743, %v1775
      %v1784 = vcombine.low %v750, %v772
      %v1785 = vcombine.high %v750, %v772
      %v1787 = vunpack.c.l.s4 1983009808
      %v1788 = vunpack.c.0.s8 %v1787
      %v1789 = vlaneseq
      %v1790 = vshrl.u32 %v1789, 7
      %v1791 = vsub.s32 %v1788, %v1790
      %v1792 = vrot.slane %v1784, %v1791
      %v1794 = vunpack.c.l.s4 1983009808
      %v1795 = vunpack.c.0.s8 %v1794
      %v1796 = vlaneseq
      %v1797 = vshrl.u32 %v1796, 7
      %v1798 = vsub.s32 %v1795, %v1797
      %v1799 = vrot.slane %v1785, %v1798
      %v1800 = vcombine.low %v761, %v783
      %v1801 = vcombine.high %v761, %v783
      %v1803 = vunpack.c.l.s4 1983009808
      %v1804 = vunpack.c.0.s8 %v1803
      %v1805 = vlaneseq
      %v1806 = vshrl.u32 %v1805, 7
      %v1807 = vsub.s32 %v1804, %v1806
      %v1808 = vrot.slane %v1800, %v1807
      %v1810 = vunpack.c.l.s4 1983009808
      %v1811 = vunpack.c.0.s8 %v1810
      %v1812 = vlaneseq
      %v1813 = vshrl.u32 %v1812, 7
      %v1814 = vsub.s32 %v1811, %v1813
      %v1815 = vrot.slane %v1801, %v1814
      %v1816 = vcombine.low %v794, %v816
      %v1817 = vcombine.high %v794, %v816
      %v1819 = vunpack.c.l.s4 1983009808
      %v1820 = vunpack.c.0.s8 %v1819
      %v1821 = vlaneseq
      %v1822 = vshrl.u32 %v1821, 7
      %v1823 = vsub.s32 %v1820, %v1822
      %v1824 = vrot.slane %v1816, %v1823
      %v1826 = vunpack.c.l.s4 1983009808
      %v1827 = vunpack.c.0.s8 %v1826
      %v1828 = vlaneseq
      %v1829 = vshrl.u32 %v1828, 7
      %v1830 = vsub.s32 %v1827, %v1829
      %v1831 = vrot.slane %v1817, %v1830
      %v1832 = vcombine.low %v805, %v827
      %v1833 = vcombine.high %v805, %v827
      %v1835 = vunpack.c.l.s4 1983009808
      %v1836 = vunpack.c.0.s8 %v1835
      %v1837 = vlaneseq
      %v1838 = vshrl.u32 %v1837, 7
      %v1839 = vsub.s32 %v1836, %v1838
      %v1840 = vrot.slane %v1832, %v1839
      %v1842 = vunpack.c.l.s4 1983009808
      %v1843 = vunpack.c.0.s8 %v1842
      %v1844 = vlaneseq
      %v1845 = vshrl.u32 %v1844, 7
      %v1846 = vsub.s32 %v1843, %v1845
      %v1847 = vrot.slane %v1833, %v1846
      %v1848 = vcombine.low %v1792, %v1808
      %v1849 = vcombine.high %v1792, %v1808
      %v1851 = vunpack.c.l.s4 1934713408
      %v1852 = vunpack.c.0.s8 %v1851
      %v1853 = vlaneseq
      %v1854 = vshrl.u32 %v1853, 7
      %v1855 = vsub.s32 %v1852, %v1854
      %v1856 = vrot.slane %v1848, %v1855
      %v1858 = vunpack.c.l.s4 1934713408
      %v1859 = vunpack.c.0.s8 %v1858
      %v1860 = vlaneseq
      %v1861 = vshrl.u32 %v1860, 7
      %v1862 = vsub.s32 %v1859, %v1861
      %v1863 = vrot.slane %v1849, %v1862
      %v1864 = vcombine.low %v1799, %v1815
      %v1865 = vcombine.high %v1799, %v1815
      %v1867 = vunpack.c.l.s4 1934713408
      %v1868 = vunpack.c.0.s8 %v1867
      %v1869 = vlaneseq
      %v1870 = vshrl.u32 %v1869, 7
      %v1871 = vsub.s32 %v1868, %v1870
      %v1872 = vrot.slane %v1864, %v1871
      %v1874 = vunpack.c.l.s4 1934713408
      %v1875 = vunpack.c.0.s8 %v1874
      %v1876 = vlaneseq
      %v1877 = vshrl.u32 %v1876, 7
      %v1878 = vsub.s32 %v1875, %v1877
      %v1879 = vrot.slane %v1865, %v1878
      %v1880 = vcombine.low %v1824, %v1840
      %v1881 = vcombine.high %v1824, %v1840
      %v1883 = vunpack.c.l.s4 1934713408
      %v1884 = vunpack.c.0.s8 %v1883
      %v1885 = vlaneseq
      %v1886 = vshrl.u32 %v1885, 7
      %v1887 = vsub.s32 %v1884, %v1886
      %v1888 = vrot.slane %v1880, %v1887
      %v1890 = vunpack.c.l.s4 1934713408
      %v1891 = vunpack.c.0.s8 %v1890
      %v1892 = vlaneseq
      %v1893 = vshrl.u32 %v1892, 7
      %v1894 = vsub.s32 %v1891, %v1893
      %v1895 = vrot.slane %v1881, %v1894
      %v1896 = vcombine.low %v1831, %v1847
      %v1897 = vcombine.high %v1831, %v1847
      %v1899 = vunpack.c.l.s4 1934713408
      %v1900 = vunpack.c.0.s8 %v1899
      %v1901 = vlaneseq
      %v1902 = vshrl.u32 %v1901, 7
      %v1903 = vsub.s32 %v1900, %v1902
      %v1904 = vrot.slane %v1896, %v1903
      %v1906 = vunpack.c.l.s4 1934713408
      %v1907 = vunpack.c.0.s8 %v1906
      %v1908 = vlaneseq
      %v1909 = vshrl.u32 %v1908, 7
      %v1910 = vsub.s32 %v1907, %v1909
      %v1911 = vrot.slane %v1897, %v1910
      %v1912 = vcombine.low %v1856, %v1888
      %v1913 = vcombine.high %v1856, %v1888
      %v1914 = vcombine.low %v1863, %v1895
      %v1915 = vcombine.high %v1863, %v1895
      %v1916 = vcombine.low %v1872, %v1904
      %v1917 = vcombine.high %v1872, %v1904
      %v1918 = vcombine.low %v1879, %v1911
      %v1919 = vcombine.high %v1879, %v1911
      %v1920 = vcombine.low %v138, %v160
      %v1921 = vcombine.high %v138, %v160
      %v1923 = vunpack.c.l.s4 1983009808
      %v1924 = vunpack.c.0.s8 %v1923
      %v1925 = vlaneseq
      %v1926 = vshrl.u32 %v1925, 7
      %v1927 = vsub.s32 %v1924, %v1926
      %v1928 = vrot.slane %v1920, %v1927
      %v1930 = vunpack.c.l.s4 1983009808
      %v1931 = vunpack.c.0.s8 %v1930
      %v1932 = vlaneseq
      %v1933 = vshrl.u32 %v1932, 7
      %v1934 = vsub.s32 %v1931, %v1933
      %v1935 = vrot.slane %v1921, %v1934
      %v1936 = vcombine.low %v149, %v171
      %v1937 = vcombine.high %v149, %v171
      %v1939 = vunpack.c.l.s4 1983009808
      %v1940 = vunpack.c.0.s8 %v1939
      %v1941 = vlaneseq
      %v1942 = vshrl.u32 %v1941, 7
      %v1943 = vsub.s32 %v1940, %v1942
      %v1944 = vrot.slane %v1936, %v1943
      %v1946 = vunpack.c.l.s4 1983009808
      %v1947 = vunpack.c.0.s8 %v1946
      %v1948 = vlaneseq
      %v1949 = vshrl.u32 %v1948, 7
      %v1950 = vsub.s32 %v1947, %v1949
      %v1951 = vrot.slane %v1937, %v1950
      %v1952 = vcombine.low %v182, %v204
      %v1953 = vcombine.high %v182, %v204
      %v1955 = vunpack.c.l.s4 1983009808
      %v1956 = vunpack.c.0.s8 %v1955
      %v1957 = vlaneseq
      %v1958 = vshrl.u32 %v1957, 7
      %v1959 = vsub.s32 %v1956, %v1958
      %v1960 = vrot.slane %v1952, %v1959
      %v1962 = vunpack.c.l.s4 1983009808
      %v1963 = vunpack.c.0.s8 %v1962
      %v1964 = vlaneseq
      %v1965 = vshrl.u32 %v1964, 7
      %v1966 = vsub.s32 %v1963, %v1965
      %v1967 = vrot.slane %v1953, %v1966
      %v1968 = vcombine.low %v193, %v215
      %v1969 = vcombine.high %v193, %v215
      %v1971 = vunpack.c.l.s4 1983009808
      %v1972 = vunpack.c.0.s8 %v1971
      %v1973 = vlaneseq
      %v1974 = vshrl.u32 %v1973, 7
      %v1975 = vsub.s32 %v1972, %v1974
      %v1976 = vrot.slane %v1968, %v1975
      %v1978 = vunpack.c.l.s4 1983009808
      %v1979 = vunpack.c.0.s8 %v1978
      %v1980 = vlaneseq
      %v1981 = vshrl.u32 %v1980, 7
      %v1982 = vsub.s32 %v1979, %v1981
      %v1983 = vrot.slane %v1969, %v1982
      %v1984 = vcombine.low %v1928, %v1944
      %v1985 = vcombine.high %v1928, %v1944
      %v1987 = vunpack.c.l.s4 1934713408
      %v1988 = vunpack.c.0.s8 %v1987
      %v1989 = vlaneseq
      %v1990 = vshrl.u32 %v1989, 7
      %v1991 = vsub.s32 %v1988, %v1990
      %v1992 = vrot.slane %v1984, %v1991
      %v1994 = vunpack.c.l.s4 1934713408
      %v1995 = vunpack.c.0.s8 %v1994
      %v1996 = vlaneseq
      %v1997 = vshrl.u32 %v1996, 7
      %v1998 = vsub.s32 %v1995, %v1997
      %v1999 = vrot.slane %v1985, %v1998
      %v2000 = vcombine.low %v1935, %v1951
      %v2001 = vcombine.high %v1935, %v1951
      %v2003 = vunpack.c.l.s4 1934713408
      %v2004 = vunpack.c.0.s8 %v2003
      %v2005 = vlaneseq
      %v2006 = vshrl.u32 %v2005, 7
      %v2007 = vsub.s32 %v2004, %v2006
      %v2008 = vrot.slane %v2000, %v2007
      %v2010 = vunpack.c.l.s4 1934713408
      %v2011 = vunpack.c.0.s8 %v2010
      %v2012 = vlaneseq
      %v2013 = vshrl.u32 %v2012, 7
      %v2014 = vsub.s32 %v2011, %v2013
      %v2015 = vrot.slane %v2001, %v2014
      %v2016 = vcombine.low %v1960, %v1976
      %v2017 = vcombine.high %v1960, %v1976
      %v2019 = vunpack.c.l.s4 1934713408
      %v2020 = vunpack.c.0.s8 %v2019
      %v2021 = vlaneseq
      %v2022 = vshrl.u32 %v2021, 7
      %v2023 = vsub.s32 %v2020, %v2022
      %v2024 = vrot.slane %v2016, %v2023
      %v2026 = vunpack.c.l.s4 1934713408
      %v2027 = vunpack.c.0.s8 %v2026
      %v2028 = vlaneseq
      %v2029 = vshrl.u32 %v2028, 7
      %v2030 = vsub.s32 %v2027, %v2029
      %v2031 = vrot.slane %v2017, %v2030
      %v2032 = vcombine.low %v1967, %v1983
      %v2033 = vcombine.high %v1967, %v1983
      %v2035 = vunpack.c.l.s4 1934713408
      %v2036 = vunpack.c.0.s8 %v2035
      %v2037 = vlaneseq
      %v2038 = vshrl.u32 %v2037, 7
      %v2039 = vsub.s32 %v2036, %v2038
      %v2040 = vrot.slane %v2032, %v2039
      %v2042 = vunpack.c.l.s4 1934713408
      %v2043 = vunpack.c.0.s8 %v2042
      %v2044 = vlaneseq
      %v2045 = vshrl.u32 %v2044, 7
      %v2046 = vsub.s32 %v2043, %v2045
      %v2047 = vrot.slane %v2033, %v2046
      %v2048 = vcombine.low %v1992, %v2024
      %v2049 = vcombine.high %v1992, %v2024
      %v2050 = vcombine.low %v1999, %v2031
      %v2051 = vcombine.high %v1999, %v2031
      %v2052 = vcombine.low %v2008, %v2040
      %v2053 = vcombine.high %v2008, %v2040
      %v2054 = vcombine.low %v2015, %v2047
      %v2055 = vcombine.high %v2015, %v2047
      %v2056 = vcombine.low %v226, %v248
      %v2057 = vcombine.high %v226, %v248
      %v2059 = vunpack.c.l.s4 1983009808
      %v2060 = vunpack.c.0.s8 %v2059
      %v2061 = vlaneseq
      %v2062 = vshrl.u32 %v2061, 7
      %v2063 = vsub.s32 %v2060, %v2062
      %v2064 = vrot.slane %v2056, %v2063
      %v2066 = vunpack.c.l.s4 1983009808
      %v2067 = vunpack.c.0.s8 %v2066
      %v2068 = vlaneseq
      %v2069 = vshrl.u32 %v2068, 7
      %v2070 = vsub.s32 %v2067, %v2069
      %v2071 = vrot.slane %v2057, %v2070
      %v2072 = vcombine.low %v237, %v259
      %v2073 = vcombine.high %v237, %v259
      %v2075 = vunpack.c.l.s4 1983009808
      %v2076 = vunpack.c.0.s8 %v2075
      %v2077 = vlaneseq
      %v2078 = vshrl.u32 %v2077, 7
      %v2079 = vsub.s32 %v2076, %v2078
      %v2080 = vrot.slane %v2072, %v2079
      %v2082 = vunpack.c.l.s4 1983009808
      %v2083 = vunpack.c.0.s8 %v2082
      %v2084 = vlaneseq
      %v2085 = vshrl.u32 %v2084, 7
      %v2086 = vsub.s32 %v2083, %v2085
      %v2087 = vrot.slane %v2073, %v2086
      %v2088 = vcombine.low %v270, %v292
      %v2089 = vcombine.high %v270, %v292
      %v2091 = vunpack.c.l.s4 1983009808
      %v2092 = vunpack.c.0.s8 %v2091
      %v2093 = vlaneseq
      %v2094 = vshrl.u32 %v2093, 7
      %v2095 = vsub.s32 %v2092, %v2094
      %v2096 = vrot.slane %v2088, %v2095
      %v2098 = vunpack.c.l.s4 1983009808
      %v2099 = vunpack.c.0.s8 %v2098
      %v2100 = vlaneseq
      %v2101 = vshrl.u32 %v2100, 7
      %v2102 = vsub.s32 %v2099, %v2101
      %v2103 = vrot.slane %v2089, %v2102
      %v2104 = vcombine.low %v281, %v303
      %v2105 = vcombine.high %v281, %v303
      %v2107 = vunpack.c.l.s4 1983009808
      %v2108 = vunpack.c.0.s8 %v2107
      %v2109 = vlaneseq
      %v2110 = vshrl.u32 %v2109, 7
      %v2111 = vsub.s32 %v2108, %v2110
      %v2112 = vrot.slane %v2104, %v2111
      %v2114 = vunpack.c.l.s4 1983009808
      %v2115 = vunpack.c.0.s8 %v2114
      %v2116 = vlaneseq
      %v2117 = vshrl.u32 %v2116, 7
      %v2118 = vsub.s32 %v2115, %v2117
      %v2119 = vrot.slane %v2105, %v2118
      %v2120 = vcombine.low %v2064, %v2080
      %v2121 = vcombine.high %v2064, %v2080
      %v2123 = vunpack.c.l.s4 1934713408
      %v2124 = vunpack.c.0.s8 %v2123
      %v2125 = vlaneseq
      %v2126 = vshrl.u32 %v2125, 7
      %v2127 = vsub.s32 %v2124, %v2126
      %v2128 = vrot.slane %v2120, %v2127
      %v2130 = vunpack.c.l.s4 1934713408
      %v2131 = vunpack.c.0.s8 %v2130
      %v2132 = vlaneseq
      %v2133 = vshrl.u32 %v2132, 7
      %v2134 = vsub.s32 %v2131, %v2133
      %v2135 = vrot.slane %v2121, %v2134
      %v2136 = vcombine.low %v2071, %v2087
      %v2137 = vcombine.high %v2071, %v2087
      %v2139 = vunpack.c.l.s4 1934713408
      %v2140 = vunpack.c.0.s8 %v2139
      %v2141 = vlaneseq
      %v2142 = vshrl.u32 %v2141, 7
      %v2143 = vsub.s32 %v2140, %v2142
      %v2144 = vrot.slane %v2136, %v2143
      %v2146 = vunpack.c.l.s4 1934713408
      %v2147 = vunpack.c.0.s8 %v2146
      %v2148 = vlaneseq
      %v2149 = vshrl.u32 %v2148, 7
      %v2150 = vsub.s32 %v2147, %v2149
      %v2151 = vrot.slane %v2137, %v2150
      %v2152 = vcombine.low %v2096, %v2112
      %v2153 = vcombine.high %v2096, %v2112
      %v2155 = vunpack.c.l.s4 1934713408
      %v2156 = vunpack.c.0.s8 %v2155
      %v2157 = vlaneseq
      %v2158 = vshrl.u32 %v2157, 7
      %v2159 = vsub.s32 %v2156, %v2158
      %v2160 = vrot.slane %v2152, %v2159
      %v2162 = vunpack.c.l.s4 1934713408
      %v2163 = vunpack.c.0.s8 %v2162
      %v2164 = vlaneseq
      %v2165 = vshrl.u32 %v2164, 7
      %v2166 = vsub.s32 %v2163, %v2165
      %v2167 = vrot.slane %v2153, %v2166
      %v2168 = vcombine.low %v2103, %v2119
      %v2169 = vcombine.high %v2103, %v2119
      %v2171 = vunpack.c.l.s4 1934713408
      %v2172 = vunpack.c.0.s8 %v2171
      %v2173 = vlaneseq
      %v2174 = vshrl.u32 %v2173, 7
      %v2175 = vsub.s32 %v2172, %v2174
      %v2176 = vrot.slane %v2168, %v2175
      %v2178 = vunpack.c.l.s4 1934713408
      %v2179 = vunpack.c.0.s8 %v2178
      %v2180 = vlaneseq
      %v2181 = vshrl.u32 %v2180, 7
      %v2182 = vsub.s32 %v2179, %v2181
      %v2183 = vrot.slane %v2169, %v2182
      %v2184 = vcombine.low %v2128, %v2160
      %v2185 = vcombine.high %v2128, %v2160
      %v2186 = vcombine.low %v2135, %v2167
      %v2187 = vcombine.high %v2135, %v2167
      %v2188 = vcombine.low %v2144, %v2176
      %v2189 = vcombine.high %v2144, %v2176
      %v2190 = vcombine.low %v2151, %v2183
      %v2191 = vcombine.high %v2151, %v2183
      %v2192 = vcombine.low %v314, %v336
      %v2193 = vcombine.high %v314, %v336
      %v2195 = vunpack.c.l.s4 1983009808
      %v2196 = vunpack.c.0.s8 %v2195
      %v2197 = vlaneseq
      %v2198 = vshrl.u32 %v2197, 7
      %v2199 = vsub.s32 %v2196, %v2198
      %v2200 = vrot.slane %v2192, %v2199
      %v2202 = vunpack.c.l.s4 1983009808
      %v2203 = vunpack.c.0.s8 %v2202
      %v2204 = vlaneseq
      %v2205 = vshrl.u32 %v2204, 7
      %v2206 = vsub.s32 %v2203, %v2205
      %v2207 = vrot.slane %v2193, %v2206
      %v2208 = vcombine.low %v325, %v347
      %v2209 = vcombine.high %v325, %v347
      %v2211 = vunpack.c.l.s4 1983009808
      %v2212 = vunpack.c.0.s8 %v2211
      %v2213 = vlaneseq
      %v2214 = vshrl.u32 %v2213, 7
      %v2215 = vsub.s32 %v2212, %v2214
      %v2216 = vrot.slane %v2208, %v2215
      %v2218 = vunpack.c.l.s4 1983009808
      %v2219 = vunpack.c.0.s8 %v2218
      %v2220 = vlaneseq
      %v2221 = vshrl.u32 %v2220, 7
      %v2222 = vsub.s32 %v2219, %v2221
      %v2223 = vrot.slane %v2209, %v2222
      %v2224 = vcombine.low %v358, %v380
      %v2225 = vcombine.high %v358, %v380
      %v2227 = vunpack.c.l.s4 1983009808
      %v2228 = vunpack.c.0.s8 %v2227
      %v2229 = vlaneseq
      %v2230 = vshrl.u32 %v2229, 7
      %v2231 = vsub.s32 %v2228, %v2230
      %v2232 = vrot.slane %v2224, %v2231
      %v2234 = vunpack.c.l.s4 1983009808
      %v2235 = vunpack.c.0.s8 %v2234
      %v2236 = vlaneseq
      %v2237 = vshrl.u32 %v2236, 7
      %v2238 = vsub.s32 %v2235, %v2237
      %v2239 = vrot.slane %v2225, %v2238
      %v2240 = vcombine.low %v369, %v391
      %v2241 = vcombine.high %v369, %v391
      %v2243 = vunpack.c.l.s4 1983009808
      %v2244 = vunpack.c.0.s8 %v2243
      %v2245 = vlaneseq
      %v2246 = vshrl.u32 %v2245, 7
      %v2247 = vsub.s32 %v2244, %v2246
      %v2248 = vrot.slane %v2240, %v2247
      %v2250 = vunpack.c.l.s4 1983009808
      %v2251 = vunpack.c.0.s8 %v2250
      %v2252 = vlaneseq
      %v2253 = vshrl.u32 %v2252, 7
      %v2254 = vsub.s32 %v2251, %v2253
      %v2255 = vrot.slane %v2241, %v2254
      %v2256 = vcombine.low %v2200, %v2216
      %v2257 = vcombine.high %v2200, %v2216
      %v2259 = vunpack.c.l.s4 1934713408
      %v2260 = vunpack.c.0.s8 %v2259
      %v2261 = vlaneseq
      %v2262 = vshrl.u32 %v2261, 7
      %v2263 = vsub.s32 %v2260, %v2262
      %v2264 = vrot.slane %v2256, %v2263
      %v2266 = vunpack.c.l.s4 1934713408
      %v2267 = vunpack.c.0.s8 %v2266
      %v2268 = vlaneseq
      %v2269 = vshrl.u32 %v2268, 7
      %v2270 = vsub.s32 %v2267, %v2269
      %v2271 = vrot.slane %v2257, %v2270
      %v2272 = vcombine.low %v2207, %v2223
      %v2273 = vcombine.high %v2207, %v2223
      %v2275 = vunpack.c.l.s4 1934713408
      %v2276 = vunpack.c.0.s8 %v2275
      %v2277 = vlaneseq
      %v2278 = vshrl.u32 %v2277, 7
      %v2279 = vsub.s32 %v2276, %v2278
      %v2280 = vrot.slane %v2272, %v2279
      %v2282 = vunpack.c.l.s4 1934713408
      %v2283 = vunpack.c.0.s8 %v2282
      %v2284 = vlaneseq
      %v2285 = vshrl.u32 %v2284, 7
      %v2286 = vsub.s32 %v2283, %v2285
      %v2287 = vrot.slane %v2273, %v2286
      %v2288 = vcombine.low %v2232, %v2248
      %v2289 = vcombine.high %v2232, %v2248
      %v2291 = vunpack.c.l.s4 1934713408
      %v2292 = vunpack.c.0.s8 %v2291
      %v2293 = vlaneseq
      %v2294 = vshrl.u32 %v2293, 7
      %v2295 = vsub.s32 %v2292, %v2294
      %v2296 = vrot.slane %v2288, %v2295
      %v2298 = vunpack.c.l.s4 1934713408
      %v2299 = vunpack.c.0.s8 %v2298
      %v2300 = vlaneseq
      %v2301 = vshrl.u32 %v2300, 7
      %v2302 = vsub.s32 %v2299, %v2301
      %v2303 = vrot.slane %v2289, %v2302
      %v2304 = vcombine.low %v2239, %v2255
      %v2305 = vcombine.high %v2239, %v2255
      %v2307 = vunpack.c.l.s4 1934713408
      %v2308 = vunpack.c.0.s8 %v2307
      %v2309 = vlaneseq
      %v2310 = vshrl.u32 %v2309, 7
      %v2311 = vsub.s32 %v2308, %v2310
      %v2312 = vrot.slane %v2304, %v2311
      %v2314 = vunpack.c.l.s4 1934713408
      %v2315 = vunpack.c.0.s8 %v2314
      %v2316 = vlaneseq
      %v2317 = vshrl.u32 %v2316, 7
      %v2318 = vsub.s32 %v2315, %v2317
      %v2319 = vrot.slane %v2305, %v2318
      %v2320 = vcombine.low %v2264, %v2296
      %v2321 = vcombine.high %v2264, %v2296
      %v2322 = vcombine.low %v2271, %v2303
      %v2323 = vcombine.high %v2271, %v2303
      %v2324 = vcombine.low %v2280, %v2312
      %v2325 = vcombine.high %v2280, %v2312
      %v2326 = vcombine.low %v2287, %v2319
      %v2327 = vcombine.high %v2287, %v2319
      %v2328 = vcombine.low %v402, %v424
      %v2329 = vcombine.high %v402, %v424
      %v2331 = vunpack.c.l.s4 1983009808
      %v2332 = vunpack.c.0.s8 %v2331
      %v2333 = vlaneseq
      %v2334 = vshrl.u32 %v2333, 7
      %v2335 = vsub.s32 %v2332, %v2334
      %v2336 = vrot.slane %v2328, %v2335
      %v2338 = vunpack.c.l.s4 1983009808
      %v2339 = vunpack.c.0.s8 %v2338
      %v2340 = vlaneseq
      %v2341 = vshrl.u32 %v2340, 7
      %v2342 = vsub.s32 %v2339, %v2341
      %v2343 = vrot.slane %v2329, %v2342
      %v2344 = vcombine.low %v413, %v435
      %v2345 = vcombine.high %v413, %v435
      %v2347 = vunpack.c.l.s4 1983009808
      %v2348 = vunpack.c.0.s8 %v2347
      %v2349 = vlaneseq
      %v2350 = vshrl.u32 %v2349, 7
      %v2351 = vsub.s32 %v2348, %v2350
      %v2352 = vrot.slane %v2344, %v2351
      %v2354 = vunpack.c.l.s4 1983009808
      %v2355 = vunpack.c.0.s8 %v2354
      %v2356 = vlaneseq
      %v2357 = vshrl.u32 %v2356, 7
      %v2358 = vsub.s32 %v2355, %v2357
      %v2359 = vrot.slane %v2345, %v2358
      %v2360 = vcombine.low %v446, %v468
      %v2361 = vcombine.high %v446, %v468
      %v2363 = vunpack.c.l.s4 1983009808
      %v2364 = vunpack.c.0.s8 %v2363
      %v2365 = vlaneseq
      %v2366 = vshrl.u32 %v2365, 7
      %v2367 = vsub.s32 %v2364, %v2366
      %v2368 = vrot.slane %v2360, %v2367
      %v2370 = vunpack.c.l.s4 1983009808
      %v2371 = vunpack.c.0.s8 %v2370
      %v2372 = vlaneseq
      %v2373 = vshrl.u32 %v2372, 7
      %v2374 = vsub.s32 %v2371, %v2373
      %v2375 = vrot.slane %v2361, %v2374
      %v2376 = vcombine.low %v457, %v479
      %v2377 = vcombine.high %v457, %v479
      %v2379 = vunpack.c.l.s4 1983009808
      %v2380 = vunpack.c.0.s8 %v2379
      %v2381 = vlaneseq
      %v2382 = vshrl.u32 %v2381, 7
      %v2383 = vsub.s32 %v2380, %v2382
      %v2384 = vrot.slane %v2376, %v2383
      %v2386 = vunpack.c.l.s4 1983009808
      %v2387 = vunpack.c.0.s8 %v2386
      %v2388 = vlaneseq
      %v2389 = vshrl.u32 %v2388, 7
      %v2390 = vsub.s32 %v2387, %v2389
      %v2391 = vrot.slane %v2377, %v2390
      %v2392 = vcombine.low %v2336, %v2352
      %v2393 = vcombine.high %v2336, %v2352
      %v2395 = vunpack.c.l.s4 1934713408
      %v2396 = vunpack.c.0.s8 %v2395
      %v2397 = vlaneseq
      %v2398 = vshrl.u32 %v2397, 7
      %v2399 = vsub.s32 %v2396, %v2398
      %v2400 = vrot.slane %v2392, %v2399
      %v2402 = vunpack.c.l.s4 1934713408
      %v2403 = vunpack.c.0.s8 %v2402
      %v2404 = vlaneseq
      %v2405 = vshrl.u32 %v2404, 7
      %v2406 = vsub.s32 %v2403, %v2405
      %v2407 = vrot.slane %v2393, %v2406
      %v2408 = vcombine.low %v2343, %v2359
      %v2409 = vcombine.high %v2343, %v2359
      %v2411 = vunpack.c.l.s4 1934713408
      %v2412 = vunpack.c.0.s8 %v2411
      %v2413 = vlaneseq
      %v2414 = vshrl.u32 %v2413, 7
      %v2415 = vsub.s32 %v2412, %v2414
      %v2416 = vrot.slane %v2408, %v2415
      %v2418 = vunpack.c.l.s4 1934713408
      %v2419 = vunpack.c.0.s8 %v2418
      %v2420 = vlaneseq
      %v2421 = vshrl.u32 %v2420, 7
      %v2422 = vsub.s32 %v2419, %v2421
      %v2423 = vrot.slane %v2409, %v2422
      %v2424 = vcombine.low %v2368, %v2384
      %v2425 = vcombine.high %v2368, %v2384
      %v2427 = vunpack.c.l.s4 1934713408
      %v2428 = vunpack.c.0.s8 %v2427
      %v2429 = vlaneseq
      %v2430 = vshrl.u32 %v2429, 7
      %v2431 = vsub.s32 %v2428, %v2430
      %v2432 = vrot.slane %v2424, %v2431
      %v2434 = vunpack.c.l.s4 1934713408
      %v2435 = vunpack.c.0.s8 %v2434
      %v2436 = vlaneseq
      %v2437 = vshrl.u32 %v2436, 7
      %v2438 = vsub.s32 %v2435, %v2437
      %v2439 = vrot.slane %v2425, %v2438
      %v2440 = vcombine.low %v2375, %v2391
      %v2441 = vcombine.high %v2375, %v2391
      %v2443 = vunpack.c.l.s4 1934713408
      %v2444 = vunpack.c.0.s8 %v2443
      %v2445 = vlaneseq
      %v2446 = vshrl.u32 %v2445, 7
      %v2447 = vsub.s32 %v2444, %v2446
      %v2448 = vrot.slane %v2440, %v2447
      %v2450 = vunpack.c.l.s4 1934713408
      %v2451 = vunpack.c.0.s8 %v2450
      %v2452 = vlaneseq
      %v2453 = vshrl.u32 %v2452, 7
      %v2454 = vsub.s32 %v2451, %v2453
      %v2455 = vrot.slane %v2441, %v2454
      %v2456 = vcombine.low %v2400, %v2432
      %v2457 = vcombine.high %v2400, %v2432
      %v2458 = vcombine.low %v2407, %v2439
      %v2459 = vcombine.high %v2407, %v2439
      %v2460 = vcombine.low %v2416, %v2448
      %v2461 = vcombine.high %v2416, %v2448
      %v2462 = vcombine.low %v2423, %v2455
      %v2463 = vcombine.high %v2423, %v2455
      %v2464 = vcombine.low %v490, %v512
      %v2465 = vcombine.high %v490, %v512
      %v2467 = vunpack.c.l.s4 1983009808
      %v2468 = vunpack.c.0.s8 %v2467
      %v2469 = vlaneseq
      %v2470 = vshrl.u32 %v2469, 7
      %v2471 = vsub.s32 %v2468, %v2470
      %v2472 = vrot.slane %v2464, %v2471
      %v2474 = vunpack.c.l.s4 1983009808
      %v2475 = vunpack.c.0.s8 %v2474
      %v2476 = vlaneseq
      %v2477 = vshrl.u32 %v2476, 7
      %v2478 = vsub.s32 %v2475, %v2477
      %v2479 = vrot.slane %v2465, %v2478
      %v2480 = vcombine.low %v501, %v523
      %v2481 = vcombine.high %v501, %v523
      %v2483 = vunpack.c.l.s4 1983009808
      %v2484 = vunpack.c.0.s8 %v2483
      %v2485 = vlaneseq
      %v2486 = vshrl.u32 %v2485, 7
      %v2487 = vsub.s32 %v2484, %v2486
      %v2488 = vrot.slane %v2480, %v2487
      %v2490 = vunpack.c.l.s4 1983009808
      %v2491 = vunpack.c.0.s8 %v2490
      %v2492 = vlaneseq
      %v2493 = vshrl.u32 %v2492, 7
      %v2494 = vsub.s32 %v2491, %v2493
      %v2495 = vrot.slane %v2481, %v2494
      %v2496 = vcombine.low %v534, %v556
      %v2497 = vcombine.high %v534, %v556
      %v2499 = vunpack.c.l.s4 1983009808
      %v2500 = vunpack.c.0.s8 %v2499
      %v2501 = vlaneseq
      %v2502 = vshrl.u32 %v2501, 7
      %v2503 = vsub.s32 %v2500, %v2502
      %v2504 = vrot.slane %v2496, %v2503
      %v2506 = vunpack.c.l.s4 1983009808
      %v2507 = vunpack.c.0.s8 %v2506
      %v2508 = vlaneseq
      %v2509 = vshrl.u32 %v2508, 7
      %v2510 = vsub.s32 %v2507, %v2509
      %v2511 = vrot.slane %v2497, %v2510
      %v2512 = vcombine.low %v545, %v567
      %v2513 = vcombine.high %v545, %v567
      %v2515 = vunpack.c.l.s4 1983009808
      %v2516 = vunpack.c.0.s8 %v2515
      %v2517 = vlaneseq
      %v2518 = vshrl.u32 %v2517, 7
      %v2519 = vsub.s32 %v2516, %v2518
      %v2520 = vrot.slane %v2512, %v2519
      %v2522 = vunpack.c.l.s4 1983009808
      %v2523 = vunpack.c.0.s8 %v2522
      %v2524 = vlaneseq
      %v2525 = vshrl.u32 %v2524, 7
      %v2526 = vsub.s32 %v2523, %v2525
      %v2527 = vrot.slane %v2513, %v2526
      %v2528 = vcombine.low %v2472, %v2488
      %v2529 = vcombine.high %v2472, %v2488
      %v2531 = vunpack.c.l.s4 1934713408
      %v2532 = vunpack.c.0.s8 %v2531
      %v2533 = vlaneseq
      %v2534 = vshrl.u32 %v2533, 7
      %v2535 = vsub.s32 %v2532, %v2534
      %v2536 = vrot.slane %v2528, %v2535
      %v2538 = vunpack.c.l.s4 1934713408
      %v2539 = vunpack.c.0.s8 %v2538
      %v2540 = vlaneseq
      %v2541 = vshrl.u32 %v2540, 7
      %v2542 = vsub.s32 %v2539, %v2541
      %v2543 = vrot.slane %v2529, %v2542
      %v2544 = vcombine.low %v2479, %v2495
      %v2545 = vcombine.high %v2479, %v2495
      %v2547 = vunpack.c.l.s4 1934713408
      %v2548 = vunpack.c.0.s8 %v2547
      %v2549 = vlaneseq
      %v2550 = vshrl.u32 %v2549, 7
      %v2551 = vsub.s32 %v2548, %v2550
      %v2552 = vrot.slane %v2544, %v2551
      %v2554 = vunpack.c.l.s4 1934713408
      %v2555 = vunpack.c.0.s8 %v2554
      %v2556 = vlaneseq
      %v2557 = vshrl.u32 %v2556, 7
      %v2558 = vsub.s32 %v2555, %v2557
      %v2559 = vrot.slane %v2545, %v2558
      %v2560 = vcombine.low %v2504, %v2520
      %v2561 = vcombine.high %v2504, %v2520
      %v2563 = vunpack.c.l.s4 1934713408
      %v2564 = vunpack.c.0.s8 %v2563
      %v2565 = vlaneseq
      %v2566 = vshrl.u32 %v2565, 7
      %v2567 = vsub.s32 %v2564, %v2566
      %v2568 = vrot.slane %v2560, %v2567
      %v2570 = vunpack.c.l.s4 1934713408
      %v2571 = vunpack.c.0.s8 %v2570
      %v2572 = vlaneseq
      %v2573 = vshrl.u32 %v2572, 7
      %v2574 = vsub.s32 %v2571, %v2573
      %v2575 = vrot.slane %v2561, %v2574
      %v2576 = vcombine.low %v2511, %v2527
      %v2577 = vcombine.high %v2511, %v2527
      %v2579 = vunpack.c.l.s4 1934713408
      %v2580 = vunpack.c.0.s8 %v2579
      %v2581 = vlaneseq
      %v2582 = vshrl.u32 %v2581, 7
      %v2583 = vsub.s32 %v2580, %v2582
      %v2584 = vrot.slane %v2576, %v2583
      %v2586 = vunpack.c.l.s4 1934713408
      %v2587 = vunpack.c.0.s8 %v2586
      %v2588 = vlaneseq
      %v2589 = vshrl.u32 %v2588, 7
      %v2590 = vsub.s32 %v2587, %v2589
      %v2591 = vrot.slane %v2577, %v2590
      %v2592 = vcombine.low %v2536, %v2568
      %v2593 = vcombine.high %v2536, %v2568
      %v2594 = vcombine.low %v2543, %v2575
      %v2595 = vcombine.high %v2543, %v2575
      %v2596 = vcombine.low %v2552, %v2584
      %v2597 = vcombine.high %v2552, %v2584
      %v2598 = vcombine.low %v2559, %v2591
      %v2599 = vcombine.high %v2559, %v2591
      %v2600 = vcombine.low %v578, %v600
      %v2601 = vcombine.high %v578, %v600
      %v2603 = vunpack.c.l.s4 1983009808
      %v2604 = vunpack.c.0.s8 %v2603
      %v2605 = vlaneseq
      %v2606 = vshrl.u32 %v2605, 7
      %v2607 = vsub.s32 %v2604, %v2606
      %v2608 = vrot.slane %v2600, %v2607
      %v2610 = vunpack.c.l.s4 1983009808
      %v2611 = vunpack.c.0.s8 %v2610
      %v2612 = vlaneseq
      %v2613 = vshrl.u32 %v2612, 7
      %v2614 = vsub.s32 %v2611, %v2613
      %v2615 = vrot.slane %v2601, %v2614
      %v2616 = vcombine.low %v589, %v611
      %v2617 = vcombine.high %v589, %v611
      %v2619 = vunpack.c.l.s4 1983009808
      %v2620 = vunpack.c.0.s8 %v2619
      %v2621 = vlaneseq
      %v2622 = vshrl.u32 %v2621, 7
      %v2623 = vsub.s32 %v2620, %v2622
      %v2624 = vrot.slane %v2616, %v2623
      %v2626 = vunpack.c.l.s4 1983009808
      %v2627 = vunpack.c.0.s8 %v2626
      %v2628 = vlaneseq
      %v2629 = vshrl.u32 %v2628, 7
      %v2630 = vsub.s32 %v2627, %v2629
      %v2631 = vrot.slane %v2617, %v2630
      %v2632 = vcombine.low %v622, %v644
      %v2633 = vcombine.high %v622, %v644
      %v2635 = vunpack.c.l.s4 1983009808
      %v2636 = vunpack.c.0.s8 %v2635
      %v2637 = vlaneseq
      %v2638 = vshrl.u32 %v2637, 7
      %v2639 = vsub.s32 %v2636, %v2638
      %v2640 = vrot.slane %v2632, %v2639
      %v2642 = vunpack.c.l.s4 1983009808
      %v2643 = vunpack.c.0.s8 %v2642
      %v2644 = vlaneseq
      %v2645 = vshrl.u32 %v2644, 7
      %v2646 = vsub.s32 %v2643, %v2645
      %v2647 = vrot.slane %v2633, %v2646
      %v2648 = vcombine.low %v633, %v655
      %v2649 = vcombine.high %v633, %v655
      %v2651 = vunpack.c.l.s4 1983009808
      %v2652 = vunpack.c.0.s8 %v2651
      %v2653 = vlaneseq
      %v2654 = vshrl.u32 %v2653, 7
      %v2655 = vsub.s32 %v2652, %v2654
      %v2656 = vrot.slane %v2648, %v2655
      %v2658 = vunpack.c.l.s4 1983009808
      %v2659 = vunpack.c.0.s8 %v2658
      %v2660 = vlaneseq
      %v2661 = vshrl.u32 %v2660, 7
      %v2662 = vsub.s32 %v2659, %v2661
      %v2663 = vrot.slane %v2649, %v2662
      %v2664 = vcombine.low %v2608, %v2624
      %v2665 = vcombine.high %v2608, %v2624
      %v2667 = vunpack.c.l.s4 1934713408
      %v2668 = vunpack.c.0.s8 %v2667
      %v2669 = vlaneseq
      %v2670 = vshrl.u32 %v2669, 7
      %v2671 = vsub.s32 %v2668, %v2670
      %v2672 = vrot.slane %v2664, %v2671
      %v2674 = vunpack.c.l.s4 1934713408
      %v2675 = vunpack.c.0.s8 %v2674
      %v2676 = vlaneseq
      %v2677 = vshrl.u32 %v2676, 7
      %v2678 = vsub.s32 %v2675, %v2677
      %v2679 = vrot.slane %v2665, %v2678
      %v2680 = vcombine.low %v2615, %v2631
      %v2681 = vcombine.high %v2615, %v2631
      %v2683 = vunpack.c.l.s4 1934713408
      %v2684 = vunpack.c.0.s8 %v2683
      %v2685 = vlaneseq
      %v2686 = vshrl.u32 %v2685, 7
      %v2687 = vsub.s32 %v2684, %v2686
      %v2688 = vrot.slane %v2680, %v2687
      %v2690 = vunpack.c.l.s4 1934713408
      %v2691 = vunpack.c.0.s8 %v2690
      %v2692 = vlaneseq
      %v2693 = vshrl.u32 %v2692, 7
      %v2694 = vsub.s32 %v2691, %v2693
      %v2695 = vrot.slane %v2681, %v2694
      %v2696 = vcombine.low %v2640, %v2656
      %v2697 = vcombine.high %v2640, %v2656
      %v2699 = vunpack.c.l.s4 1934713408
      %v2700 = vunpack.c.0.s8 %v2699
      %v2701 = vlaneseq
      %v2702 = vshrl.u32 %v2701, 7
      %v2703 = vsub.s32 %v2700, %v2702
      %v2704 = vrot.slane %v2696, %v2703
      %v2706 = vunpack.c.l.s4 1934713408
      %v2707 = vunpack.c.0.s8 %v2706
      %v2708 = vlaneseq
      %v2709 = vshrl.u32 %v2708, 7
      %v2710 = vsub.s32 %v2707, %v2709
      %v2711 = vrot.slane %v2697, %v2710
      %v2712 = vcombine.low %v2647, %v2663
      %v2713 = vcombine.high %v2647, %v2663
      %v2715 = vunpack.c.l.s4 1934713408
      %v2716 = vunpack.c.0.s8 %v2715
      %v2717 = vlaneseq
      %v2718 = vshrl.u32 %v2717, 7
      %v2719 = vsub.s32 %v2716, %v2718
      %v2720 = vrot.slane %v2712, %v2719
      %v2722 = vunpack.c.l.s4 1934713408
      %v2723 = vunpack.c.0.s8 %v2722
      %v2724 = vlaneseq
      %v2725 = vshrl.u32 %v2724, 7
      %v2726 = vsub.s32 %v2723, %v2725
      %v2727 = vrot.slane %v2713, %v2726
      %v2728 = vcombine.low %v2672, %v2704
      %v2729 = vcombine.high %v2672, %v2704
      %v2730 = vcombine.low %v2679, %v2711
      %v2731 = vcombine.high %v2679, %v2711
      %v2732 = vcombine.low %v2688, %v2720
      %v2733 = vcombine.high %v2688, %v2720
      %v2734 = vcombine.low %v2695, %v2727
      %v2735 = vcombine.high %v2695, %v2727
      %v2736 = vcombine.low %v666, %v688
      %v2737 = vcombine.high %v666, %v688
      %v2739 = vunpack.c.l.s4 1983009808
      %v2740 = vunpack.c.0.s8 %v2739
      %v2741 = vlaneseq
      %v2742 = vshrl.u32 %v2741, 7
      %v2743 = vsub.s32 %v2740, %v2742
      %v2744 = vrot.slane %v2736, %v2743
      %v2746 = vunpack.c.l.s4 1983009808
      %v2747 = vunpack.c.0.s8 %v2746
      %v2748 = vlaneseq
      %v2749 = vshrl.u32 %v2748, 7
      %v2750 = vsub.s32 %v2747, %v2749
      %v2751 = vrot.slane %v2737, %v2750
      %v2752 = vcombine.low %v677, %v699
      %v2753 = vcombine.high %v677, %v699
      %v2755 = vunpack.c.l.s4 1983009808
      %v2756 = vunpack.c.0.s8 %v2755
      %v2757 = vlaneseq
      %v2758 = vshrl.u32 %v2757, 7
      %v2759 = vsub.s32 %v2756, %v2758
      %v2760 = vrot.slane %v2752, %v2759
      %v2762 = vunpack.c.l.s4 1983009808
      %v2763 = vunpack.c.0.s8 %v2762
      %v2764 = vlaneseq
      %v2765 = vshrl.u32 %v2764, 7
      %v2766 = vsub.s32 %v2763, %v2765
      %v2767 = vrot.slane %v2753, %v2766
      %v2768 = vcombine.low %v710, %v732
      %v2769 = vcombine.high %v710, %v732
      %v2771 = vunpack.c.l.s4 1983009808
      %v2772 = vunpack.c.0.s8 %v2771
      %v2773 = vlaneseq
      %v2774 = vshrl.u32 %v2773, 7
      %v2775 = vsub.s32 %v2772, %v2774
      %v2776 = vrot.slane %v2768, %v2775
      %v2778 = vunpack.c.l.s4 1983009808
      %v2779 = vunpack.c.0.s8 %v2778
      %v2780 = vlaneseq
      %v2781 = vshrl.u32 %v2780, 7
      %v2782 = vsub.s32 %v2779, %v2781
      %v2783 = vrot.slane %v2769, %v2782
      %v2784 = vcombine.low %v721, %v743
      %v2785 = vcombine.high %v721, %v743
      %v2787 = vunpack.c.l.s4 1983009808
      %v2788 = vunpack.c.0.s8 %v2787
      %v2789 = vlaneseq
      %v2790 = vshrl.u32 %v2789, 7
      %v2791 = vsub.s32 %v2788, %v2790
      %v2792 = vrot.slane %v2784, %v2791
      %v2794 = vunpack.c.l.s4 1983009808
      %v2795 = vunpack.c.0.s8 %v2794
      %v2796 = vlaneseq
      %v2797 = vshrl.u32 %v2796, 7
      %v2798 = vsub.s32 %v2795, %v2797
      %v2799 = vrot.slane %v2785, %v2798
      %v2800 = vcombine.low %v2744, %v2760
      %v2801 = vcombine.high %v2744, %v2760
      %v2803 = vunpack.c.l.s4 1934713408
      %v2804 = vunpack.c.0.s8 %v2803
      %v2805 = vlaneseq
      %v2806 = vshrl.u32 %v2805, 7
      %v2807 = vsub.s32 %v2804, %v2806
      %v2808 = vrot.slane %v2800, %v2807
      %v2810 = vunpack.c.l.s4 1934713408
      %v2811 = vunpack.c.0.s8 %v2810
      %v2812 = vlaneseq
      %v2813 = vshrl.u32 %v2812, 7
      %v2814 = vsub.s32 %v2811, %v2813
      %v2815 = vrot.slane %v2801, %v2814
      %v2816 = vcombine.low %v2751, %v2767
      %v2817 = vcombine.high %v2751, %v2767
      %v2819 = vunpack.c.l.s4 1934713408
      %v2820 = vunpack.c.0.s8 %v2819
      %v2821 = vlaneseq
      %v2822 = vshrl.u32 %v2821, 7
      %v2823 = vsub.s32 %v2820, %v2822
      %v2824 = vrot.slane %v2816, %v2823
      %v2826 = vunpack.c.l.s4 1934713408
      %v2827 = vunpack.c.0.s8 %v2826
      %v2828 = vlaneseq
      %v2829 = vshrl.u32 %v2828, 7
      %v2830 = vsub.s32 %v2827, %v2829
      %v2831 = vrot.slane %v2817, %v2830
      %v2832 = vcombine.low %v2776, %v2792
      %v2833 = vcombine.high %v2776, %v2792
      %v2835 = vunpack.c.l.s4 1934713408
      %v2836 = vunpack.c.0.s8 %v2835
      %v2837 = vlaneseq
      %v2838 = vshrl.u32 %v2837, 7
      %v2839 = vsub.s32 %v2836, %v2838
      %v2840 = vrot.slane %v2832, %v2839
      %v2842 = vunpack.c.l.s4 1934713408
      %v2843 = vunpack.c.0.s8 %v2842
      %v2844 = vlaneseq
      %v2845 = vshrl.u32 %v2844, 7
      %v2846 = vsub.s32 %v2843, %v2845
      %v2847 = vrot.slane %v2833, %v2846
      %v2848 = vcombine.low %v2783, %v2799
      %v2849 = vcombine.high %v2783, %v2799
      %v2851 = vunpack.c.l.s4 1934713408
      %v2852 = vunpack.c.0.s8 %v2851
      %v2853 = vlaneseq
      %v2854 = vshrl.u32 %v2853, 7
      %v2855 = vsub.s32 %v2852, %v2854
      %v2856 = vrot.slane %v2848, %v2855
      %v2858 = vunpack.c.l.s4 1934713408
      %v2859 = vunpack.c.0.s8 %v2858
      %v2860 = vlaneseq
      %v2861 = vshrl.u32 %v2860, 7
      %v2862 = vsub.s32 %v2859, %v2861
      %v2863 = vrot.slane %v2849, %v2862
      %v2864 = vcombine.low %v2808, %v2840
      %v2865 = vcombine.high %v2808, %v2840
      %v2866 = vcombine.low %v2815, %v2847
      %v2867 = vcombine.high %v2815, %v2847
      %v2868 = vcombine.low %v2824, %v2856
      %v2869 = vcombine.high %v2824, %v2856
      %v2870 = vcombine.low %v2831, %v2863
      %v2871 = vcombine.high %v2831, %v2863
      %v2872 = vcombine.low %v754, %v776
      %v2873 = vcombine.high %v754, %v776
      %v2875 = vunpack.c.l.s4 1983009808
      %v2876 = vunpack.c.0.s8 %v2875
      %v2877 = vlaneseq
      %v2878 = vshrl.u32 %v2877, 7
      %v2879 = vsub.s32 %v2876, %v2878
      %v2880 = vrot.slane %v2872, %v2879
      %v2882 = vunpack.c.l.s4 1983009808
      %v2883 = vunpack.c.0.s8 %v2882
      %v2884 = vlaneseq
      %v2885 = vshrl.u32 %v2884, 7
      %v2886 = vsub.s32 %v2883, %v2885
      %v2887 = vrot.slane %v2873, %v2886
      %v2888 = vcombine.low %v765, %v787
      %v2889 = vcombine.high %v765, %v787
      %v2891 = vunpack.c.l.s4 1983009808
      %v2892 = vunpack.c.0.s8 %v2891
      %v2893 = vlaneseq
      %v2894 = vshrl.u32 %v2893, 7
      %v2895 = vsub.s32 %v2892, %v2894
      %v2896 = vrot.slane %v2888, %v2895
      %v2898 = vunpack.c.l.s4 1983009808
      %v2899 = vunpack.c.0.s8 %v2898
      %v2900 = vlaneseq
      %v2901 = vshrl.u32 %v2900, 7
      %v2902 = vsub.s32 %v2899, %v2901
      %v2903 = vrot.slane %v2889, %v2902
      %v2904 = vcombine.low %v798, %v820
      %v2905 = vcombine.high %v798, %v820
      %v2907 = vunpack.c.l.s4 1983009808
      %v2908 = vunpack.c.0.s8 %v2907
      %v2909 = vlaneseq
      %v2910 = vshrl.u32 %v2909, 7
      %v2911 = vsub.s32 %v2908, %v2910
      %v2912 = vrot.slane %v2904, %v2911
      %v2914 = vunpack.c.l.s4 1983009808
      %v2915 = vunpack.c.0.s8 %v2914
      %v2916 = vlaneseq
      %v2917 = vshrl.u32 %v2916, 7
      %v2918 = vsub.s32 %v2915, %v2917
      %v2919 = vrot.slane %v2905, %v2918
      %v2920 = vcombine.low %v809, %v831
      %v2921 = vcombine.high %v809, %v831
      %v2923 = vunpack.c.l.s4 1983009808
      %v2924 = vunpack.c.0.s8 %v2923
      %v2925 = vlaneseq
      %v2926 = vshrl.u32 %v2925, 7
      %v2927 = vsub.s32 %v2924, %v2926
      %v2928 = vrot.slane %v2920, %v2927
      %v2930 = vunpack.c.l.s4 1983009808
      %v2931 = vunpack.c.0.s8 %v2930
      %v2932 = vlaneseq
      %v2933 = vshrl.u32 %v2932, 7
      %v2934 = vsub.s32 %v2931, %v2933
      %v2935 = vrot.slane %v2921, %v2934
      %v2936 = vcombine.low %v2880, %v2896
      %v2937 = vcombine.high %v2880, %v2896
      %v2939 = vunpack.c.l.s4 1934713408
      %v2940 = vunpack.c.0.s8 %v2939
      %v2941 = vlaneseq
      %v2942 = vshrl.u32 %v2941, 7
      %v2943 = vsub.s32 %v2940, %v2942
      %v2944 = vrot.slane %v2936, %v2943
      %v2946 = vunpack.c.l.s4 1934713408
      %v2947 = vunpack.c.0.s8 %v2946
      %v2948 = vlaneseq
      %v2949 = vshrl.u32 %v2948, 7
      %v2950 = vsub.s32 %v2947, %v2949
      %v2951 = vrot.slane %v2937, %v2950
      %v2952 = vcombine.low %v2887, %v2903
      %v2953 = vcombine.high %v2887, %v2903
      %v2955 = vunpack.c.l.s4 1934713408
      %v2956 = vunpack.c.0.s8 %v2955
      %v2957 = vlaneseq
      %v2958 = vshrl.u32 %v2957, 7
      %v2959 = vsub.s32 %v2956, %v2958
      %v2960 = vrot.slane %v2952, %v2959
      %v2962 = vunpack.c.l.s4 1934713408
      %v2963 = vunpack.c.0.s8 %v2962
      %v2964 = vlaneseq
      %v2965 = vshrl.u32 %v2964, 7
      %v2966 = vsub.s32 %v2963, %v2965
      %v2967 = vrot.slane %v2953, %v2966
      %v2968 = vcombine.low %v2912, %v2928
      %v2969 = vcombine.high %v2912, %v2928
      %v2971 = vunpack.c.l.s4 1934713408
      %v2972 = vunpack.c.0.s8 %v2971
      %v2973 = vlaneseq
      %v2974 = vshrl.u32 %v2973, 7
      %v2975 = vsub.s32 %v2972, %v2974
      %v2976 = vrot.slane %v2968, %v2975
      %v2978 = vunpack.c.l.s4 1934713408
      %v2979 = vunpack.c.0.s8 %v2978
      %v2980 = vlaneseq
      %v2981 = vshrl.u32 %v2980, 7
      %v2982 = vsub.s32 %v2979, %v2981
      %v2983 = vrot.slane %v2969, %v2982
      %v2984 = vcombine.low %v2919, %v2935
      %v2985 = vcombine.high %v2919, %v2935
      %v2987 = vunpack.c.l.s4 1934713408
      %v2988 = vunpack.c.0.s8 %v2987
      %v2989 = vlaneseq
      %v2990 = vshrl.u32 %v2989, 7
      %v2991 = vsub.s32 %v2988, %v2990
      %v2992 = vrot.slane %v2984, %v2991
      %v2994 = vunpack.c.l.s4 1934713408
      %v2995 = vunpack.c.0.s8 %v2994
      %v2996 = vlaneseq
      %v2997 = vshrl.u32 %v2996, 7
      %v2998 = vsub.s32 %v2995, %v2997
      %v2999 = vrot.slane %v2985, %v2998
      %v3000 = vcombine.low %v2944, %v2976
      %v3001 = vcombine.high %v2944, %v2976
      %v3002 = vcombine.low %v2951, %v2983
      %v3003 = vcombine.high %v2951, %v2983
      %v3004 = vcombine.low %v2960, %v2992
      %v3005 = vcombine.high %v2960, %v2992
      %v3006 = vcombine.low %v2967, %v2999
      %v3007 = vcombine.high %v2967, %v2999
      %3016 = vrot.lane.b32.xlu0 %v961, 2
      %v3017 = vpop.permute.xlu0 %3016
      %3018 = vrot.lane.b32.xlu0 %v1097, 2
      %v3019 = vpop.permute.xlu0 %3018
      %3020 = vrot.lane.b32.xlu0 %v1233, 2
      %v3021 = vpop.permute.xlu0 %3020
      %3022 = vrot.lane.b32.xlu0 %v1369, 2
      %v3023 = vpop.permute.xlu0 %3022
      %3024 = vrot.lane.b32.xlu0 %v1505, 2
      %v3025 = vpop.permute.xlu0 %3024
      %3026 = vrot.lane.b32.xlu0 %v1641, 2
      %v3027 = vpop.permute.xlu0 %3026
      %3028 = vrot.lane.b32.xlu0 %v1777, 2
      %v3029 = vpop.permute.xlu0 %3028
      %3030 = vrot.lane.b32.xlu0 %v1913, 2
      %v3031 = vpop.permute.xlu0 %3030
      %3048 = vrot.lane.b32.xlu0 %v962, 4
      %v3049 = vpop.permute.xlu0 %3048
      %3050 = vrot.lane.b32.xlu0 %v1098, 4
      %v3051 = vpop.permute.xlu0 %3050
      %3052 = vrot.lane.b32.xlu0 %v1234, 4
      %v3053 = vpop.permute.xlu0 %3052
      %3054 = vrot.lane.b32.xlu0 %v1370, 4
      %v3055 = vpop.permute.xlu0 %3054
      %3056 = vrot.lane.b32.xlu0 %v1506, 4
      %v3057 = vpop.permute.xlu0 %3056
      %3058 = vrot.lane.b32.xlu0 %v1642, 4
      %v3059 = vpop.permute.xlu0 %3058
      %3060 = vrot.lane.b32.xlu0 %v1778, 4
      %v3061 = vpop.permute.xlu0 %3060
      %3062 = vrot.lane.b32.xlu0 %v1914, 4
      %v3063 = vpop.permute.xlu0 %3062
      %3080 = vrot.lane.b32.xlu0 %v963, 6
      %v3081 = vpop.permute.xlu0 %3080
      %3082 = vrot.lane.b32.xlu0 %v1099, 6
      %v3083 = vpop.permute.xlu0 %3082
      %3084 = vrot.lane.b32.xlu0 %v1235, 6
      %v3085 = vpop.permute.xlu0 %3084
      %3086 = vrot.lane.b32.xlu0 %v1371, 6
      %v3087 = vpop.permute.xlu0 %3086
      %3088 = vrot.lane.b32.xlu0 %v1507, 6
      %v3089 = vpop.permute.xlu0 %3088
      %3090 = vrot.lane.b32.xlu0 %v1643, 6
      %v3091 = vpop.permute.xlu0 %3090
      %3092 = vrot.lane.b32.xlu0 %v1779, 6
      %v3093 = vpop.permute.xlu0 %3092
      %3094 = vrot.lane.b32.xlu0 %v1915, 6
      %v3095 = vpop.permute.xlu0 %3094
      %3112 = vrot.lane.b32.xlu0 %v964, 8
      %v3113 = vpop.permute.xlu0 %3112
      %3114 = vrot.lane.b32.xlu0 %v1100, 8
      %v3115 = vpop.permute.xlu0 %3114
      %3116 = vrot.lane.b32.xlu0 %v1236, 8
      %v3117 = vpop.permute.xlu0 %3116
      %3118 = vrot.lane.b32.xlu0 %v1372, 8
      %v3119 = vpop.permute.xlu0 %3118
      %3120 = vrot.lane.b32.xlu0 %v1508, 8
      %v3121 = vpop.permute.xlu0 %3120
      %3122 = vrot.lane.b32.xlu0 %v1644, 8
      %v3123 = vpop.permute.xlu0 %3122
      %3124 = vrot.lane.b32.xlu0 %v1780, 8
      %v3125 = vpop.permute.xlu0 %3124
      %3126 = vrot.lane.b32.xlu0 %v1916, 8
      %v3127 = vpop.permute.xlu0 %3126
      %3144 = vrot.lane.b32.xlu0 %v965, 10
      %v3145 = vpop.permute.xlu0 %3144
      %3146 = vrot.lane.b32.xlu0 %v1101, 10
      %v3147 = vpop.permute.xlu0 %3146
      %3148 = vrot.lane.b32.xlu0 %v1237, 10
      %v3149 = vpop.permute.xlu0 %3148
      %3150 = vrot.lane.b32.xlu0 %v1373, 10
      %v3151 = vpop.permute.xlu0 %3150
      %3152 = vrot.lane.b32.xlu0 %v1509, 10
      %v3153 = vpop.permute.xlu0 %3152
      %3154 = vrot.lane.b32.xlu0 %v1645, 10
      %v3155 = vpop.permute.xlu0 %3154
      %3156 = vrot.lane.b32.xlu0 %v1781, 10
      %v3157 = vpop.permute.xlu0 %3156
      %3158 = vrot.lane.b32.xlu0 %v1917, 10
      %v3159 = vpop.permute.xlu0 %3158
      %3176 = vrot.lane.b32.xlu0 %v966, 12
      %v3177 = vpop.permute.xlu0 %3176
      %3178 = vrot.lane.b32.xlu0 %v1102, 12
      %v3179 = vpop.permute.xlu0 %3178
      %3180 = vrot.lane.b32.xlu0 %v1238, 12
      %v3181 = vpop.permute.xlu0 %3180
      %3182 = vrot.lane.b32.xlu0 %v1374, 12
      %v3183 = vpop.permute.xlu0 %3182
      %3184 = vrot.lane.b32.xlu0 %v1510, 12
      %v3185 = vpop.permute.xlu0 %3184
      %3186 = vrot.lane.b32.xlu0 %v1646, 12
      %v3187 = vpop.permute.xlu0 %3186
      %3188 = vrot.lane.b32.xlu0 %v1782, 12
      %v3189 = vpop.permute.xlu0 %3188
      %3190 = vrot.lane.b32.xlu0 %v1918, 12
      %v3191 = vpop.permute.xlu0 %3190
      %3208 = vrot.lane.b32.xlu0 %v967, 14
      %v3209 = vpop.permute.xlu0 %3208
      %3210 = vrot.lane.b32.xlu0 %v1103, 14
      %v3211 = vpop.permute.xlu0 %3210
      %3212 = vrot.lane.b32.xlu0 %v1239, 14
      %v3213 = vpop.permute.xlu0 %3212
      %3214 = vrot.lane.b32.xlu0 %v1375, 14
      %v3215 = vpop.permute.xlu0 %3214
      %3216 = vrot.lane.b32.xlu0 %v1511, 14
      %v3217 = vpop.permute.xlu0 %3216
      %3218 = vrot.lane.b32.xlu0 %v1647, 14
      %v3219 = vpop.permute.xlu0 %3218
      %3220 = vrot.lane.b32.xlu0 %v1783, 14
      %v3221 = vpop.permute.xlu0 %3220
      %3222 = vrot.lane.b32.xlu0 %v1919, 14
      %v3223 = vpop.permute.xlu0 %3222
      %3240 = vrot.lane.b32.xlu0 %v2048, 16
      %v3241 = vpop.permute.xlu0 %3240
      %3242 = vrot.lane.b32.xlu0 %v2184, 16
      %v3243 = vpop.permute.xlu0 %3242
      %3244 = vrot.lane.b32.xlu0 %v2320, 16
      %v3245 = vpop.permute.xlu0 %3244
      %3246 = vrot.lane.b32.xlu0 %v2456, 16
      %v3247 = vpop.permute.xlu0 %3246
      %3248 = vrot.lane.b32.xlu0 %v2592, 16
      %v3249 = vpop.permute.xlu0 %3248
      %3250 = vrot.lane.b32.xlu0 %v2728, 16
      %v3251 = vpop.permute.xlu0 %3250
      %3252 = vrot.lane.b32.xlu0 %v2864, 16
      %v3253 = vpop.permute.xlu0 %3252
      %3254 = vrot.lane.b32.xlu0 %v3000, 16
      %v3255 = vpop.permute.xlu0 %3254
      %3272 = vrot.lane.b32.xlu0 %v2049, 18
      %v3273 = vpop.permute.xlu0 %3272
      %3274 = vrot.lane.b32.xlu0 %v2185, 18
      %v3275 = vpop.permute.xlu0 %3274
      %3276 = vrot.lane.b32.xlu0 %v2321, 18
      %v3277 = vpop.permute.xlu0 %3276
      %3278 = vrot.lane.b32.xlu0 %v2457, 18
      %v3279 = vpop.permute.xlu0 %3278
      %3280 = vrot.lane.b32.xlu0 %v2593, 18
      %v3281 = vpop.permute.xlu0 %3280
      %3282 = vrot.lane.b32.xlu0 %v2729, 18
      %v3283 = vpop.permute.xlu0 %3282
      %3284 = vrot.lane.b32.xlu0 %v2865, 18
      %v3285 = vpop.permute.xlu0 %3284
      %3286 = vrot.lane.b32.xlu0 %v3001, 18
      %v3287 = vpop.permute.xlu0 %3286
      %3304 = vrot.lane.b32.xlu0 %v2050, 20
      %v3305 = vpop.permute.xlu0 %3304
      %3306 = vrot.lane.b32.xlu0 %v2186, 20
      %v3307 = vpop.permute.xlu0 %3306
      %3308 = vrot.lane.b32.xlu0 %v2322, 20
      %v3309 = vpop.permute.xlu0 %3308
      %3310 = vrot.lane.b32.xlu0 %v2458, 20
      %v3311 = vpop.permute.xlu0 %3310
      %3312 = vrot.lane.b32.xlu0 %v2594, 20
      %v3313 = vpop.permute.xlu0 %3312
      %3314 = vrot.lane.b32.xlu0 %v2730, 20
      %v3315 = vpop.permute.xlu0 %3314
      %3316 = vrot.lane.b32.xlu0 %v2866, 20
      %v3317 = vpop.permute.xlu0 %3316
      %3318 = vrot.lane.b32.xlu0 %v3002, 20
      %v3319 = vpop.permute.xlu0 %3318
      %3336 = vrot.lane.b32.xlu0 %v2051, 22
      %v3337 = vpop.permute.xlu0 %3336
      %3338 = vrot.lane.b32.xlu0 %v2187, 22
      %v3339 = vpop.permute.xlu0 %3338
      %3340 = vrot.lane.b32.xlu0 %v2323, 22
      %v3341 = vpop.permute.xlu0 %3340
      %3342 = vrot.lane.b32.xlu0 %v2459, 22
      %v3343 = vpop.permute.xlu0 %3342
      %3344 = vrot.lane.b32.xlu0 %v2595, 22
      %v3345 = vpop.permute.xlu0 %3344
      %3346 = vrot.lane.b32.xlu0 %v2731, 22
      %v3347 = vpop.permute.xlu0 %3346
      %3348 = vrot.lane.b32.xlu0 %v2867, 22
      %v3349 = vpop.permute.xlu0 %3348
      %3350 = vrot.lane.b32.xlu0 %v3003, 22
      %v3351 = vpop.permute.xlu0 %3350
      %3368 = vrot.lane.b32.xlu0 %v2052, 24
      %v3369 = vpop.permute.xlu0 %3368
      %3370 = vrot.lane.b32.xlu0 %v2188, 24
      %v3371 = vpop.permute.xlu0 %3370
      %3372 = vrot.lane.b32.xlu0 %v2324, 24
      %v3373 = vpop.permute.xlu0 %3372
      %3374 = vrot.lane.b32.xlu0 %v2460, 24
      %v3375 = vpop.permute.xlu0 %3374
      %3376 = vrot.lane.b32.xlu0 %v2596, 24
      %v3377 = vpop.permute.xlu0 %3376
      %3378 = vrot.lane.b32.xlu0 %v2732, 24
      %v3379 = vpop.permute.xlu0 %3378
      %3380 = vrot.lane.b32.xlu0 %v2868, 24
      %v3381 = vpop.permute.xlu0 %3380
      %3382 = vrot.lane.b32.xlu0 %v3004, 24
      %v3383 = vpop.permute.xlu0 %3382
      %3400 = vrot.lane.b32.xlu0 %v2053, 26
      %v3401 = vpop.permute.xlu0 %3400
      %3402 = vrot.lane.b32.xlu0 %v2189, 26
      %v3403 = vpop.permute.xlu0 %3402
      %3404 = vrot.lane.b32.xlu0 %v2325, 26
      %v3405 = vpop.permute.xlu0 %3404
      %3406 = vrot.lane.b32.xlu0 %v2461, 26
      %v3407 = vpop.permute.xlu0 %3406
      %3408 = vrot.lane.b32.xlu0 %v2597, 26
      %v3409 = vpop.permute.xlu0 %3408
      %3410 = vrot.lane.b32.xlu0 %v2733, 26
      %v3411 = vpop.permute.xlu0 %3410
      %3412 = vrot.lane.b32.xlu0 %v2869, 26
      %v3413 = vpop.permute.xlu0 %3412
      %3414 = vrot.lane.b32.xlu0 %v3005, 26
      %v3415 = vpop.permute.xlu0 %3414
      %3432 = vrot.lane.b32.xlu0 %v2054, 28
      %v3433 = vpop.permute.xlu0 %3432
      %3434 = vrot.lane.b32.xlu0 %v2190, 28
      %v3435 = vpop.permute.xlu0 %3434
      %3436 = vrot.lane.b32.xlu0 %v2326, 28
      %v3437 = vpop.permute.xlu0 %3436
      %3438 = vrot.lane.b32.xlu0 %v2462, 28
      %v3439 = vpop.permute.xlu0 %3438
      %3440 = vrot.lane.b32.xlu0 %v2598, 28
      %v3441 = vpop.permute.xlu0 %3440
      %3442 = vrot.lane.b32.xlu0 %v2734, 28
      %v3443 = vpop.permute.xlu0 %3442
      %3444 = vrot.lane.b32.xlu0 %v2870, 28
      %v3445 = vpop.permute.xlu0 %3444
      %3446 = vrot.lane.b32.xlu0 %v3006, 28
      %v3447 = vpop.permute.xlu0 %3446
      %3464 = vrot.lane.b32.xlu0 %v2055, 30
      %v3465 = vpop.permute.xlu0 %3464
      %3466 = vrot.lane.b32.xlu0 %v2191, 30
      %v3467 = vpop.permute.xlu0 %3466
      %3468 = vrot.lane.b32.xlu0 %v2327, 30
      %v3469 = vpop.permute.xlu0 %3468
      %3470 = vrot.lane.b32.xlu0 %v2463, 30
      %v3471 = vpop.permute.xlu0 %3470
      %3472 = vrot.lane.b32.xlu0 %v2599, 30
      %v3473 = vpop.permute.xlu0 %3472
      %3474 = vrot.lane.b32.xlu0 %v2735, 30
      %v3475 = vpop.permute.xlu0 %3474
      %3476 = vrot.lane.b32.xlu0 %v2871, 30
      %v3477 = vpop.permute.xlu0 %3476
      %3478 = vrot.lane.b32.xlu0 %v3007, 30
      %v3479 = vpop.permute.xlu0 %3478
      %vm3488 = vcmask 15360
      %v3489 = vsel %vm3488, %v960, %v3017
      %v3490 = vsel %vm3488, %v1096, %v3019
      %v3491 = vsel %vm3488, %v1232, %v3021
      %v3492 = vsel %vm3488, %v1368, %v3023
      %v3493 = vsel %vm3488, %v1504, %v3025
      %v3494 = vsel %vm3488, %v1640, %v3027
      %v3495 = vsel %vm3488, %v1776, %v3029
      %v3496 = vsel %vm3488, %v1912, %v3031
      %vm3497 = vcmask 31744
      %v3498 = vsel %vm3497, %v3489, %v3049
      %v3499 = vsel %vm3497, %v3490, %v3051
      %v3500 = vsel %vm3497, %v3491, %v3053
      %v3501 = vsel %vm3497, %v3492, %v3055
      %v3502 = vsel %vm3497, %v3493, %v3057
      %v3503 = vsel %vm3497, %v3494, %v3059
      %v3504 = vsel %vm3497, %v3495, %v3061
      %v3505 = vsel %vm3497, %v3496, %v3063
      %vm3506 = vcmask 48128
      %v3507 = vsel %vm3506, %v3498, %v3081
      %v3508 = vsel %vm3506, %v3499, %v3083
      %v3509 = vsel %vm3506, %v3500, %v3085
      %v3510 = vsel %vm3506, %v3501, %v3087
      %v3511 = vsel %vm3506, %v3502, %v3089
      %v3512 = vsel %vm3506, %v3503, %v3091
      %v3513 = vsel %vm3506, %v3504, %v3093
      %v3514 = vsel %vm3506, %v3505, %v3095
      %vm3515 = vcmask 64512
      %v3516 = vsel %vm3515, %v3507, %v3113
      %v3517 = vsel %vm3515, %v3508, %v3115
      %v3518 = vsel %vm3515, %v3509, %v3117
      %v3519 = vsel %vm3515, %v3510, %v3119
      %v3520 = vsel %vm3515, %v3511, %v3121
      %v3521 = vsel %vm3515, %v3512, %v3123
      %v3522 = vsel %vm3515, %v3513, %v3125
      %v3523 = vsel %vm3515, %v3514, %v3127
      %vm3524 = vcmask 80896
      %v3525 = vsel %vm3524, %v3516, %v3145
      %v3526 = vsel %vm3524, %v3517, %v3147
      %v3527 = vsel %vm3524, %v3518, %v3149
      %v3528 = vsel %vm3524, %v3519, %v3151
      %v3529 = vsel %vm3524, %v3520, %v3153
      %v3530 = vsel %vm3524, %v3521, %v3155
      %v3531 = vsel %vm3524, %v3522, %v3157
      %v3532 = vsel %vm3524, %v3523, %v3159
      %vm3533 = vcmask 97280
      %v3534 = vsel %vm3533, %v3525, %v3177
      %v3535 = vsel %vm3533, %v3526, %v3179
      %v3536 = vsel %vm3533, %v3527, %v3181
      %v3537 = vsel %vm3533, %v3528, %v3183
      %v3538 = vsel %vm3533, %v3529, %v3185
      %v3539 = vsel %vm3533, %v3530, %v3187
      %v3540 = vsel %vm3533, %v3531, %v3189
      %v3541 = vsel %vm3533, %v3532, %v3191
      %vm3542 = vcmask 113664
      %v3543 = vsel %vm3542, %v3534, %v3209
      %v3544 = vsel %vm3542, %v3535, %v3211
      %v3545 = vsel %vm3542, %v3536, %v3213
      %v3546 = vsel %vm3542, %v3537, %v3215
      %v3547 = vsel %vm3542, %v3538, %v3217
      %v3548 = vsel %vm3542, %v3539, %v3219
      %v3549 = vsel %vm3542, %v3540, %v3221
      %v3550 = vsel %vm3542, %v3541, %v3223
      %vm3551 = vcmask 130048
      %v3552 = vsel %vm3551, %v3543, %v3241
      %v3553 = vsel %vm3551, %v3544, %v3243
      %v3554 = vsel %vm3551, %v3545, %v3245
      %v3555 = vsel %vm3551, %v3546, %v3247
      %v3556 = vsel %vm3551, %v3547, %v3249
      %v3557 = vsel %vm3551, %v3548, %v3251
      %v3558 = vsel %vm3551, %v3549, %v3253
      %v3559 = vsel %vm3551, %v3550, %v3255
      %vm3560 = vcmask 146432
      %v3561 = vsel %vm3560, %v3552, %v3273
      %v3562 = vsel %vm3560, %v3553, %v3275
      %v3563 = vsel %vm3560, %v3554, %v3277
      %v3564 = vsel %vm3560, %v3555, %v3279
      %v3565 = vsel %vm3560, %v3556, %v3281
      %v3566 = vsel %vm3560, %v3557, %v3283
      %v3567 = vsel %vm3560, %v3558, %v3285
      %v3568 = vsel %vm3560, %v3559, %v3287
      %vm3569 = vcmask 162816
      %v3570 = vsel %vm3569, %v3561, %v3305
      %v3571 = vsel %vm3569, %v3562, %v3307
      %v3572 = vsel %vm3569, %v3563, %v3309
      %v3573 = vsel %vm3569, %v3564, %v3311
      %v3574 = vsel %vm3569, %v3565, %v3313
      %v3575 = vsel %vm3569, %v3566, %v3315
      %v3576 = vsel %vm3569, %v3567, %v3317
      %v3577 = vsel %vm3569, %v3568, %v3319
      %vm3578 = vcmask 179200
      %v3579 = vsel %vm3578, %v3570, %v3337
      %v3580 = vsel %vm3578, %v3571, %v3339
      %v3581 = vsel %vm3578, %v3572, %v3341
      %v3582 = vsel %vm3578, %v3573, %v3343
      %v3583 = vsel %vm3578, %v3574, %v3345
      %v3584 = vsel %vm3578, %v3575, %v3347
      %v3585 = vsel %vm3578, %v3576, %v3349
      %v3586 = vsel %vm3578, %v3577, %v3351
      %vm3587 = vcmask 195584
      %v3588 = vsel %vm3587, %v3579, %v3369
      %v3589 = vsel %vm3587, %v3580, %v3371
      %v3590 = vsel %vm3587, %v3581, %v3373
      %v3591 = vsel %vm3587, %v3582, %v3375
      %v3592 = vsel %vm3587, %v3583, %v3377
      %v3593 = vsel %vm3587, %v3584, %v3379
      %v3594 = vsel %vm3587, %v3585, %v3381
      %v3595 = vsel %vm3587, %v3586, %v3383
      %vm3596 = vcmask 211968
      %v3597 = vsel %vm3596, %v3588, %v3401
      %v3598 = vsel %vm3596, %v3589, %v3403
      %v3599 = vsel %vm3596, %v3590, %v3405
      %v3600 = vsel %vm3596, %v3591, %v3407
      %v3601 = vsel %vm3596, %v3592, %v3409
      %v3602 = vsel %vm3596, %v3593, %v3411
      %v3603 = vsel %vm3596, %v3594, %v3413
      %v3604 = vsel %vm3596, %v3595, %v3415
      %vm3605 = vcmask 228352
      %v3606 = vsel %vm3605, %v3597, %v3433
      %v3607 = vsel %vm3605, %v3598, %v3435
      %v3608 = vsel %vm3605, %v3599, %v3437
      %v3609 = vsel %vm3605, %v3600, %v3439
      %v3610 = vsel %vm3605, %v3601, %v3441
      %v3611 = vsel %vm3605, %v3602, %v3443
      %v3612 = vsel %vm3605, %v3603, %v3445
      %v3613 = vsel %vm3605, %v3604, %v3447
      %vm3614 = vcmask 244736
      %v3615 = vsel %vm3614, %v3606, %v3465
      %v3616 = vsel %vm3614, %v3607, %v3467
      %v3617 = vsel %vm3614, %v3608, %v3469
      %v3618 = vsel %vm3614, %v3609, %v3471
      %v3619 = vsel %vm3614, %v3610, %v3473
      %v3620 = vsel %vm3614, %v3611, %v3475
      %v3621 = vsel %vm3614, %v3612, %v3477
      %v3622 = vsel %vm3614, %v3613, %v3479
      %3631 = vrot.lane.b32.xlu0 %v3615, 32
      %v3632 = vpop.permute.xlu0 %3631
      %3633 = vrot.lane.b32.xlu0 %v3616, 32
      %v3634 = vpop.permute.xlu0 %3633
      %3635 = vrot.lane.b32.xlu0 %v3617, 32
      %v3636 = vpop.permute.xlu0 %3635
      %3637 = vrot.lane.b32.xlu0 %v3618, 32
      %v3638 = vpop.permute.xlu0 %3637
      %3639 = vrot.lane.b32.xlu0 %v3619, 32
      %v3640 = vpop.permute.xlu0 %3639
      %3641 = vrot.lane.b32.xlu0 %v3620, 32
      %v3642 = vpop.permute.xlu0 %3641
      %3643 = vrot.lane.b32.xlu0 %v3621, 32
      %v3644 = vpop.permute.xlu0 %3643
      %3645 = vrot.lane.b32.xlu0 %v3622, 32
      %v3646 = vpop.permute.xlu0 %3645
      %vm3655 = vcmask 261120
      %v3656 = vsel %vm3655, %v3615, %v3632
      %v3657 = vsel %vm3655, %v3616, %v3634
      %v3658 = vsel %vm3655, %v3617, %v3636
      %v3659 = vsel %vm3655, %v3618, %v3638
      %v3660 = vsel %vm3655, %v3619, %v3640
      %v3661 = vsel %vm3655, %v3620, %v3642
      %v3662 = vsel %vm3655, %v3621, %v3644
      %v3663 = vsel %vm3655, %v3622, %v3646
      %vm3664 = vcmask 523264
      %3665 = vst.msk [vmem:[%s118] sm:$0xff] %vm3664, %v3656
      %3666 = vst.msk [vmem:[%s118 + $0x8] sm:$0xff] %vm3664, %v3657
      %3667 = vst.msk [vmem:[%s118 + $0x10] sm:$0xff] %vm3664, %v3658
      %3668 = vst.msk [vmem:[%s118 + $0x18] sm:$0xff] %vm3664, %v3659
      %3669 = vst.msk [vmem:[%s118 + $0x20] sm:$0xff] %vm3664, %v3660
      %3670 = vst.msk [vmem:[%s118 + $0x28] sm:$0xff] %vm3664, %v3661
      %3671 = vst.msk [vmem:[%s118 + $0x30] sm:$0xff] %vm3664, %v3662
      %3672 = vst.msk [vmem:[%s118 + $0x38] sm:$0xff] %vm3664, %v3663
      %s3673 = smul.u32 8, %s12
      %p3674 = scmp.lt.s32.totalorder %s3673, 15
      %s3675 = scalar_select %p3674, %s3673, 15
      %s3676 = smul.addr %s3675, 8
      %s3677 = scalar_lea.vmem %s1, %s3676
      // Predicated region
      $region25: #{tpu_custom_call.1} parent=23 // pred_check
        %p3678 = pneg %p56
      $region26: #{tpu_custom_call.1} parent=23 // pred_check_branch
        %3680 = sbr.rel (%p3678) target = $region28
      $region27: #{tpu_custom_call.1} parent=23 // pred_region
        %s3681 = smul.u32 8, %s12
      $region28: #{tpu_custom_call.1} parent=23 // pred_fallthru
        _
    $region24: #{tpu_custom_call.1} parent=5 // pred_fallthru
      _
    %p3682 = scmp.le.s32.totalorder 2, %s7
    // Predicated region
    $region29: #{tpu_custom_call.1} parent=5 // pred_check
      %p3683 = pneg %p3682
    $region30: #{tpu_custom_call.1} parent=5 // pred_check_branch
      %3685 = sbr.rel (%p3683) target = $region32
    $region31: #{tpu_custom_call.1} parent=5 // pred_region
      %s3686 = ssub.s32 %s7, 2
      // Predicated region
      $region33: #{tpu_custom_call.1} parent=31 // pred_check
        %p3687 = pneg %p62
      $region34: #{tpu_custom_call.1} parent=31 // pred_check_branch
        %3689 = sbr.rel (%p3687) target = $region36
      $region35: #{tpu_custom_call.1} parent=31 // pred_region
        %s3690 = smul.u32 8, %s13
        %p3691 = scmp.lt.s32.totalorder %s3690, 15
        %s3692 = scalar_select %p3691, %s3690, 15
        %s3693 = smul.addr %s3692, 8
        %s3694 = scalar_lea.vmem %s1, %s3693
      $region36: #{tpu_custom_call.1} parent=31 // pred_fallthru
        _
    $region32: #{tpu_custom_call.1} parent=5 // pred_fallthru
      _
  $region6: #{tpu_custom_call.1} parent=0 // loop_footer
    %s11 = sadd.s32 1, %s7
  $region7: #{tpu_custom_call.1} parent=0 // loop_footer_branch
    %6 = sbr.rel target = $region3
  $region8: #{tpu_custom_call.1} parent=0 // loop_exit
    _

</llo_original>
